<compile_context>
chip_gen: v6e
topology: v6e:2x2x1
jax: 0.10.0
libtpu: 0.0.40
codegen_flags: <defaults>
</compile_context>

<pallas_src>
import math

import jax
import jax.numpy as jnp
from jax import lax
from jax.experimental import pallas as pl
from jax.experimental.pallas import tpu as pltpu


def _attention_kernel(
    x_ref,     # (1, D, S)   feature-major input (lanes = sequence positions)
    wqkv_ref,  # (6A, D)     stacked [Wq1*c; Wq2*c; Wk1; Wv1; Wk2; Wv2]  (c = 1/sqrt(A))
    bqkv_ref,  # (6A, 1)     stacked biases in the same order (q biases pre-scaled)
    wp_ref,    # (D, 2A)     output-projection weight (PyTorch (out, in) layout)
    bp_ref,    # (D, 1)
    o_ref,     # (1, D, S)
):
    A = wp_ref.shape[1] // 2
    x = x_ref[0]                                                        # (D, S) f32

    # Single fused Q/K/V projection for both heads.  Contraction depth is D (tiny),
    # so keep it f32 — no bf16 casts, negligible MXU cost.
    qkv = jnp.dot(wqkv_ref[...], x,
                  preferred_element_type=jnp.float32) + bqkv_ref[...]   # (6A, S)

    def head(h):
        q = qkv[h * A:(h + 1) * A]                      # (A, S)  scale already folded
        k = qkv[(2 + 2 * h) * A:(3 + 2 * h) * A]        # (A, S)
        v = qkv[(3 + 2 * h) * A:(4 + 2 * h) * A]        # (A, S)
        # Scores in (key, query) orientation; contract the A axes directly
        # (no materialized k.T).  bf16 operands, f32 accumulation.
        s = lax.dot_general(
            k.astype(jnp.bfloat16), q.astype(jnp.bfloat16),
            dimension_numbers=(((0,), (0,)), ((), ())),
            preferred_element_type=jnp.float32)                         # (S_key, S_q)
        m = jnp.max(s, axis=0, keepdims=True)                           # (1, S_q)
        e = jnp.exp(s - m)                                              # (S, S) f32; s dead
        denom = jnp.sum(e, axis=0, keepdims=True)                       # (1, S_q) f32
        # Deferred normalization: matmul the unnormalized probs, then scale the
        # small (A, S_q) result with an approx reciprocal (EUP slot).
        hv = jnp.dot(v.astype(jnp.bfloat16), e.astype(jnp.bfloat16),
                     preferred_element_type=jnp.float32)                # (A, S_q)
        return hv * pl.reciprocal(denom, approx=True)

    h_all = jnp.concatenate([head(0), head(1)], axis=0)                 # (2A, S)
    # Output projection contracts only 2A — keep f32, no casts.
    outT = jnp.dot(wp_ref[...], h_all,
                   preferred_element_type=jnp.float32) + bp_ref[...]    # (D, S)
    o_ref[0] = outT.astype(o_ref.dtype)


def attention_pallas(x_nchw, params):
    B, D, W, H = x_nchw.shape
    S = W * H
    A = params["wq1"].shape[0]          # PyTorch layout: (out=A, in=D)
    c = 1.0 / math.sqrt(A)

    # NCHW (B, D, W, H) -> feature-major (B, D, S): pure reshape, NO transpose.
    xT = x_nchw.reshape(B, D, S)

    # Stack all six projection weights; fold the softmax scale into Wq/bq (exact f32).
    wqkv = jnp.concatenate(
        [params["wq1"] * c, params["wq2"] * c,
         params["wk1"], params["wv1"],
         params["wk2"], params["wv2"]], axis=0)                           # (6A, D)
    bqkv = jnp.concatenate(
        [params["bq1"] * c, params["bq2"] * c,
         params["bk1"], params["bv1"],
         params["bk2"], params["bv2"]], axis=0)[:, None]                  # (6A, 1)
    wp = params["wp"]                   # (D, 2A)
    bp = params["bp"][:, None]          # (D, 1)

    cost = pl.CostEstimate(
        flops=int(B * (2 * S * D * 6 * A        # fused QKV projection
                       + 8 * A * S * S          # scores + prob@V, 2 heads
                       + 2 * S * 2 * A * D)),   # output projection
        transcendentals=int(B * 2 * S * S),
        bytes_accessed=int(4 * (2 * B * D * S
                                + wqkv.size + bqkv.size + wp.size + bp.size)),
    )

    def const2d(shape):
        return pl.BlockSpec(shape, lambda b: (0, 0))

    outT = pl.pallas_call(
        _attention_kernel,
        out_shape=jax.ShapeDtypeStruct((B, D, S), jnp.float32),
        grid_spec=pltpu.PrefetchScalarGridSpec(
            num_scalar_prefetch=0,
            grid=(B,),                                               # one step per batch
            in_specs=[
                pl.BlockSpec((1, D, S), lambda b: (b, 0, 0)),        # x (full sequence)
                const2d((6 * A, D)), const2d((6 * A, 1)),
                const2d((D, 2 * A)), const2d((D, 1)),
            ],
            out_specs=pl.BlockSpec((1, D, S), lambda b: (b, 0, 0)),
        ),
        compiler_params=pltpu.CompilerParams(
            dimension_semantics=("parallel",),
            vmem_limit_bytes=32 * 1024 * 1024,
        ),
        cost_estimate=cost,
    )(xT, wqkv, bqkv, wp, bp)

    # Kernel output is feature-major (B, D, S); bring it to the (B, S, D) layout the
    # PyTorch code has right before its final reshape (tiny XLA transpose), then do
    # the same raw row-major reshape to NCHW (bug-for-bug parity with torch .reshape).
    out_seq = jnp.transpose(outT, (0, 2, 1))
    return out_seq.reshape(B, D, W, H)


def attention_reference(x_nchw, params):
    """Pure-JAX reference mirroring the PyTorch forward exactly (f32)."""
    B, D, W, H = x_nchw.shape
    S = W * H
    A = params["wq1"].shape[0]
    x = jnp.transpose(x_nchw, (0, 2, 3, 1)).reshape(B, S, D)

    def head(wq, bq, wk, bk, wv, bv):
        q = x @ wq.T + bq
        k = x @ wk.T + bk
        v = x @ wv.T + bv
        s = jnp.einsum("bsa,bta->bst", q, k) / math.sqrt(A)
        p = jax.nn.softmax(s, axis=-1)
        return jnp.einsum("bst,bta->bsa", p, v)

    h1 = head(params["wq1"], params["bq1"], params["wk1"], params["bk1"],
              params["wv1"], params["bv1"])
    h2 = head(params["wq2"], params["bq2"], params["wk2"], params["bk2"],
              params["wv2"], params["bv2"])
    mh = jnp.concatenate([h1, h2], axis=-1)
    out = mh @ params["wp"].T + params["bp"]
    return out.reshape(B, D, W, H)


def init_params(key, input_dims, attention_dims):
    """Deterministic init (uniform like torch Linear default). Weights stored in
    PyTorch (out_features, in_features) layout; biases as (out_features,)."""
    ks = jax.random.split(key, 16)
    D, A = input_dims, attention_dims

    def lin(kw, kb, fan_in, out_f, in_f):
        bound = 1.0 / math.sqrt(fan_in)
        w = jax.random.uniform(kw, (out_f, in_f), jnp.float32, -bound, bound)
        b = jax.random.uniform(kb, (out_f,), jnp.float32, -bound, bound)
        return w, b

    wq1, bq1 = lin(ks[0], ks[1], D, A, D)
    wk1, bk1 = lin(ks[2], ks[3], D, A, D)
    wv1, bv1 = lin(ks[4], ks[5], D, A, D)
    wq2, bq2 = lin(ks[6], ks[7], D, A, D)
    wk2, bk2 = lin(ks[8], ks[9], D, A, D)
    wv2, bv2 = lin(ks[10], ks[11], D, A, D)
    wp, bp = lin(ks[12], ks[13], 2 * A, D, 2 * A)   # Linear(2A -> D)

    return dict(wq1=wq1, bq1=bq1, wk1=wk1, bk1=bk1, wv1=wv1, bv1=bv1,
                wq2=wq2, bq2=bq2, wk2=wk2, bk2=bk2, wv2=wv2, bv2=bv2,
                wp=wp, bp=bp)


if __name__ == "__main__":
    key = jax.random.PRNGKey(0)
    k_x, k_p = jax.random.split(key)

    B, D, W, H = 2, 4, 16, 16        # input_dims = 4 (channels), S = 256
    A = 8                            # attention_dims

    x = jax.random.normal(k_x, (B, D, W, H), jnp.float32)
    params = init_params(k_p, D, A)

    out = attention_pallas(x, params)
    out = jax.block_until_ready(out)

    ref = attention_reference(x, params)
    assert out.shape == (B, D, W, H)
    # bf16 MXU operands for the big matmuls (f32 accumulation) + approx reciprocal.
    assert jnp.allclose(out, ref, atol=3e-2, rtol=3e-2), "mismatch vs reference"

    print("KERNEL_OK")
</pallas_src>

<mosaic_0001>
module attributes {stable_mosaic.version = 11 : i64} {
  func.func @_attention_kernel(%arg0: i32, %arg1: memref<1x4x256xf32, #tpu.memory_space<vmem>>, %arg2: memref<48x4xf32, #tpu.memory_space<vmem>>, %arg3: memref<48x1xf32, #tpu.memory_space<vmem>>, %arg4: memref<4x16xf32, #tpu.memory_space<vmem>>, %arg5: memref<4x1xf32, #tpu.memory_space<vmem>>, %arg6: memref<1x4x256xf32, #tpu.memory_space<vmem>>) attributes {dimension_semantics = [#tpu.dimension_semantics<parallel>], iteration_bounds = array<i64: 2>, scalar_prefetch = 0 : i64, scratch_operands = 0 : i64, tpu.core_type = #tpu.core_type<tc>, window_params = [{transform_indices = @transform_0, window_bounds = array<i64: 1, 4, 256>}, {pipeline_mode = #tpu.pipeline_mode<synchronous>, transform_indices = @transform_1, window_bounds = array<i64: 48, 4>}, {pipeline_mode = #tpu.pipeline_mode<synchronous>, transform_indices = @transform_2, window_bounds = array<i64: 48, 1>}, {pipeline_mode = #tpu.pipeline_mode<synchronous>, transform_indices = @transform_3, window_bounds = array<i64: 4, 16>}, {pipeline_mode = #tpu.pipeline_mode<synchronous>, transform_indices = @transform_4, window_bounds = array<i64: 4, 1>}, {transform_indices = @transform_5, window_bounds = array<i64: 1, 4, 256>}]} {
    %c0 = arith.constant 0 : index
    %c0_0 = arith.constant 0 : index
    %c0_1 = arith.constant 0 : index
    %0 = vector.load %arg1[%c0, %c0_0, %c0_1] : memref<1x4x256xf32, #tpu.memory_space<vmem>>, vector<1x4x256xf32>
    %1 = vector.shape_cast %0 : vector<1x4x256xf32> to vector<4x256xf32>
    %c0_2 = arith.constant 0 : index
    %c0_3 = arith.constant 0 : index
    %2 = vector.load %arg2[%c0_2, %c0_3] : memref<48x4xf32, #tpu.memory_space<vmem>>, vector<48x4xf32>
    %cst = arith.constant dense<0.000000e+00> : vector<48x256xf32>
    %3 = tpu.matmul %2, %1, %cst {dimension_numbers = #tpu.dot_dimension_numbers<[1], [0], [0], [1], [0, 0, 1, 1], [], []>} : vector<48x4xf32>, vector<4x256xf32>, vector<48x256xf32> -> vector<48x256xf32>
    %c0_4 = arith.constant 0 : index
    %c0_5 = arith.constant 0 : index
    %4 = vector.load %arg3[%c0_4, %c0_5] : memref<48x1xf32, #tpu.memory_space<vmem>>, vector<48x1xf32>
    %5 = vector.broadcast %4 : vector<48x1xf32> to vector<48x256xf32>
    %6 = arith.addf %3, %5 : vector<48x256xf32>
    %7 = vector.extract_strided_slice %6 {offsets = [0, 0], sizes = [8, 256], strides = [1, 1]} : vector<48x256xf32> to vector<8x256xf32>
    %8 = vector.extract_strided_slice %6 {offsets = [16, 0], sizes = [8, 256], strides = [1, 1]} : vector<48x256xf32> to vector<8x256xf32>
    %9 = vector.extract_strided_slice %6 {offsets = [24, 0], sizes = [8, 256], strides = [1, 1]} : vector<48x256xf32> to vector<8x256xf32>
    %10 = arith.truncf %8 : vector<8x256xf32> to vector<8x256xbf16>
    %11 = arith.truncf %7 : vector<8x256xf32> to vector<8x256xbf16>
    %cst_6 = arith.constant dense<0.000000e+00> : vector<256x256xf32>
    %12 = tpu.matmul %10, %11, %cst_6 {dimension_numbers = #tpu.dot_dimension_numbers<[0], [0], [1], [1], [0, 1, 1, 1], [], []>} : vector<8x256xbf16>, vector<8x256xbf16>, vector<256x256xf32> -> vector<256x256xf32>
    %cst_7 = arith.constant dense<0xFF800000> : vector<256xf32>
    %13 = vector.multi_reduction <maximumf>, %12, %cst_7 [0] : vector<256x256xf32> to vector<256xf32>
    %14 = vector.shape_cast %13 : vector<256xf32> to vector<1x256xf32>
    %15 = vector.broadcast %14 : vector<1x256xf32> to vector<256x256xf32>
    %16 = arith.subf %12, %15 : vector<256x256xf32>
    %17 = math.exp %16 : vector<256x256xf32>
    %cst_8 = arith.constant dense<0.000000e+00> : vector<256xf32>
    %18 = vector.multi_reduction <add>, %17, %cst_8 [0] : vector<256x256xf32> to vector<256xf32>
    %19 = vector.shape_cast %18 : vector<256xf32> to vector<1x256xf32>
    %20 = arith.truncf %9 : vector<8x256xf32> to vector<8x256xbf16>
    %21 = arith.truncf %17 : vector<256x256xf32> to vector<256x256xbf16>
    %cst_9 = arith.constant dense<0.000000e+00> : vector<8x256xf32>
    %22 = tpu.matmul %20, %21, %cst_9 {dimension_numbers = #tpu.dot_dimension_numbers<[1], [0], [0], [1], [0, 0, 1, 1], [], []>} : vector<8x256xbf16>, vector<256x256xbf16>, vector<8x256xf32> -> vector<8x256xf32>
    %23 = tpu.reciprocal %19 {approx = true} : vector<1x256xf32> -> vector<1x256xf32>
    %24 = vector.broadcast %23 : vector<1x256xf32> to vector<8x256xf32>
    %25 = arith.mulf %22, %24 : vector<8x256xf32>
    %26 = vector.extract_strided_slice %6 {offsets = [8, 0], sizes = [8, 256], strides = [1, 1]} : vector<48x256xf32> to vector<8x256xf32>
    %27 = vector.extract_strided_slice %6 {offsets = [32, 0], sizes = [8, 256], strides = [1, 1]} : vector<48x256xf32> to vector<8x256xf32>
    %28 = vector.extract_strided_slice %6 {offsets = [40, 0], sizes = [8, 256], strides = [1, 1]} : vector<48x256xf32> to vector<8x256xf32>
    %29 = arith.truncf %27 : vector<8x256xf32> to vector<8x256xbf16>
    %30 = arith.truncf %26 : vector<8x256xf32> to vector<8x256xbf16>
    %cst_10 = arith.constant dense<0.000000e+00> : vector<256x256xf32>
    %31 = tpu.matmul %29, %30, %cst_10 {dimension_numbers = #tpu.dot_dimension_numbers<[0], [0], [1], [1], [0, 1, 1, 1], [], []>} : vector<8x256xbf16>, vector<8x256xbf16>, vector<256x256xf32> -> vector<256x256xf32>
    %cst_11 = arith.constant dense<0xFF800000> : vector<256xf32>
    %32 = vector.multi_reduction <maximumf>, %31, %cst_11 [0] : vector<256x256xf32> to vector<256xf32>
    %33 = vector.shape_cast %32 : vector<256xf32> to vector<1x256xf32>
    %34 = vector.broadcast %33 : vector<1x256xf32> to vector<256x256xf32>
    %35 = arith.subf %31, %34 : vector<256x256xf32>
    %36 = math.exp %35 : vector<256x256xf32>
    %cst_12 = arith.constant dense<0.000000e+00> : vector<256xf32>
    %37 = vector.multi_reduction <add>, %36, %cst_12 [0] : vector<256x256xf32> to vector<256xf32>
    %38 = vector.shape_cast %37 : vector<256xf32> to vector<1x256xf32>
    %39 = arith.truncf %28 : vector<8x256xf32> to vector<8x256xbf16>
    %40 = arith.truncf %36 : vector<256x256xf32> to vector<256x256xbf16>
    %cst_13 = arith.constant dense<0.000000e+00> : vector<8x256xf32>
    %41 = tpu.matmul %39, %40, %cst_13 {dimension_numbers = #tpu.dot_dimension_numbers<[1], [0], [0], [1], [0, 0, 1, 1], [], []>} : vector<8x256xbf16>, vector<256x256xbf16>, vector<8x256xf32> -> vector<8x256xf32>
    %42 = tpu.reciprocal %38 {approx = true} : vector<1x256xf32> -> vector<1x256xf32>
    %43 = vector.broadcast %42 : vector<1x256xf32> to vector<8x256xf32>
    %44 = arith.mulf %41, %43 : vector<8x256xf32>
    %45 = tpu.concatenate %25, %44 in 0 : vector<8x256xf32>, vector<8x256xf32> -> vector<16x256xf32>
    %c0_14 = arith.constant 0 : index
    %c0_15 = arith.constant 0 : index
    %46 = vector.load %arg4[%c0_14, %c0_15] : memref<4x16xf32, #tpu.memory_space<vmem>>, vector<4x16xf32>
    %cst_16 = arith.constant dense<0.000000e+00> : vector<4x256xf32>
    %47 = tpu.matmul %46, %45, %cst_16 {dimension_numbers = #tpu.dot_dimension_numbers<[1], [0], [0], [1], [0, 0, 1, 1], [], []>} : vector<4x16xf32>, vector<16x256xf32>, vector<4x256xf32> -> vector<4x256xf32>
    %c0_17 = arith.constant 0 : index
    %c0_18 = arith.constant 0 : index
    %48 = vector.load %arg5[%c0_17, %c0_18] : memref<4x1xf32, #tpu.memory_space<vmem>>, vector<4x1xf32>
    %49 = vector.broadcast %48 : vector<4x1xf32> to vector<4x256xf32>
    %50 = arith.addf %47, %49 : vector<4x256xf32>
    %c0_19 = arith.constant 0 : index
    %c0_20 = arith.constant 0 : index
    %c0_21 = arith.constant 0 : index
    %51 = vector.load %arg6[%c0_19, %c0_20, %c0_21] : memref<1x4x256xf32, #tpu.memory_space<vmem>>, vector<1x4x256xf32>
    %52 = vector.shape_cast %51 : vector<1x4x256xf32> to vector<4x256xf32>
    %53 = vector.shape_cast %50 : vector<4x256xf32> to vector<1x4x256xf32>
    tpu.vector_store %arg6[%c0_19, %c0_20, %c0_21], %53 {strides = array<i32>} : memref<1x4x256xf32, #tpu.memory_space<vmem>>, vector<1x4x256xf32>,
    return
  }
  func.func @transform_0(%arg0: i32) -> (i32, i32, i32) {
    %c0_i32 = arith.constant 0 : i32
    %c0_i32_0 = arith.constant 0 : i32
    %c0_i32_1 = arith.constant 0 : i32
    return %arg0, %c0_i32, %c0_i32_0 : i32, i32, i32
  }
  func.func @transform_1(%arg0: i32) -> (i32, i32) {
    %c0_i32 = arith.constant 0 : i32
    %c0_i32_0 = arith.constant 0 : i32
    %c0_i32_1 = arith.constant 0 : i32
    return %c0_i32, %c0_i32_0 : i32, i32
  }
  func.func @transform_2(%arg0: i32) -> (i32, i32) {
    %c0_i32 = arith.constant 0 : i32
    %c0_i32_0 = arith.constant 0 : i32
    %c0_i32_1 = arith.constant 0 : i32
    return %c0_i32, %c0_i32_0 : i32, i32
  }
  func.func @transform_3(%arg0: i32) -> (i32, i32) {
    %c0_i32 = arith.constant 0 : i32
    %c0_i32_0 = arith.constant 0 : i32
    %c0_i32_1 = arith.constant 0 : i32
    return %c0_i32, %c0_i32_0 : i32, i32
  }
  func.func @transform_4(%arg0: i32) -> (i32, i32) {
    %c0_i32 = arith.constant 0 : i32
    %c0_i32_0 = arith.constant 0 : i32
    %c0_i32_1 = arith.constant 0 : i32
    return %c0_i32, %c0_i32_0 : i32, i32
  }
  func.func @transform_5(%arg0: i32) -> (i32, i32, i32) {
    %c0_i32 = arith.constant 0 : i32
    %c0_i32_0 = arith.constant 0 : i32
    %c0_i32_1 = arith.constant 0 : i32
    return %arg0, %c0_i32, %c0_i32_0 : i32, i32, i32
  }
}

</mosaic_0001>

<llo_original>
// kernel: tpu_custom_call.1
$region0: #{tpu_custom_call.1}
  #allocation0 [shape = 'u32[]', space=smem, size = 0x4, offset = 0x4, fixed_abs, tag = 'smem constant byte address 0x4 - core index']
  #allocation1 [shape = 'u32[144,128]{1,0:T(1,128)}', space=vmem, size = 0x12000, scoped, tag = 'internal scratch']
  %s0 = inlined_call_operand.vmem [shape: f32[2,4,256], index: 0, kind: input, shape index: {}]
  %s1 = inlined_call_operand.vmem [shape: f32[48,4], index: 1, kind: input, shape index: {}]
  %s2 = inlined_call_operand.vmem [shape: f32[48,1], index: 2, kind: input, shape index: {}]
  %s3 = inlined_call_operand.vmem [shape: f32[4,16], index: 3, kind: input, shape index: {}]
  %s4 = inlined_call_operand.vmem [shape: f32[4,1], index: 4, kind: input, shape index: {}]
  %s5 = inlined_call_operand.hbm [shape: f32[2,4,256], index: 5, kind: output, shape index: {}]
  %s6 = sld [smem:[#allocation0]]
  $region53: #{tpu_custom_call.1} parent=0
    _
  %s8 = ssub.s32 1, %s6
  %s9 = scalar_select 0, %s8, %s6
  $region1: #{tpu_custom_call.1} parent=0
    #allocation2 [shape = 'u8[8192]{0}', space=vmem, size = 0x2000, scoped, tag = 'output window, operand 0']
    #allocation3 [shape = 's32[2]{0}', space=sflag, size = 0x8, scoped, tag = 'scoped memory for tpu_custom_call.1']
    %10 = vsyncpa [#allocation3], 0
    %s11 = scalar_lea.sflag [#allocation3], 1
    %12 = vsyncpa %s11, 0
    loop: start=0, step=1, limit=4
    $region2: #{tpu_custom_call.1} parent=1 // loop_pre_header
      _
    $region3: #{tpu_custom_call.1} parent=1 // loop_header
      %s14 = sphi 0, %s18
      %p15 = scmp.ge.s32.totalorder %s14, 4
      %s24 = sphi 0, %s26
      %s27 = sphi 0, %s24
      %s28 = sphi 0, %s27
      %s44 = sphi 0, %s28
      %s48 = sphi 0, %s48
      %s50 = sphi 0, %s48
      %s51 = sphi 0, %s50
      %s65 = sphi 0, %s51
      %s69 = sphi 0, %s69
      %s71 = sphi 0, %s69
      %s72 = sphi 0, %s71
      %s86 = sphi 0, %s72
      %s90 = sphi 0, %s90
      %s92 = sphi 0, %s90
      %s93 = sphi 0, %s92
      %s107 = sphi 0, %s93
      %s111 = sphi 0, %s111
      %s113 = sphi 0, %s111
      %s114 = sphi 0, %s113
      %s128 = sphi 0, %s114
      %s134 = sphi 0, %s136
      %s137 = sphi 0, %s134
      %s138 = sphi 0, %s137
      %s154 = sphi 0, %s138
    $region4: #{tpu_custom_call.1} parent=1 // loop_header_branch
      %17 = sbr.rel (%p15) target = $region8
    $region5: #{tpu_custom_call.1} parent=1 // loop_body
      %s19 = ssub.s32 %s14, 1
      %s20 = ssub.s32 %s14, 2
      %s21 = sadd.s32 %s14, 1
      %s22 = ssub.s32 %s14, %s21
      %p23 = scmp.eq.s32.totalorder %s22, 0
      %s25 = sadd.s32 %s24, 1
      %s26 = scalar_select %p23, %s24, %s25
      %p29 = pneg %p23
      %p30 = scmp.eq.s32.totalorder %s14, 1
      %p31 = por %p29, %p30
      %p32 = scmp.ne.s32.totalorder %s24, %s27
      %p33 = scmp.eq.s32.totalorder %s14, 0
      %p34 = por %p32, %p33
      %p35 = scmp.ne.s32.totalorder %s24, %s27
      %p36 = scmp.eq.s32.totalorder %s19, 1
      %p37 = por %p35, %p36
      %p38 = scmp.ne.s32.totalorder %s27, %s28
      %p39 = scmp.eq.s32.totalorder %s19, 0
      %p40 = por %p38, %p39
      %p41 = scmp.ne.s32.totalorder %s27, %s28
      %p42 = scmp.eq.s32.totalorder %s20, 1
      %p43 = por %p41, %p42
      %p45 = scmp.ne.s32.totalorder %s28, %s44
      %p46 = scmp.eq.s32.totalorder %s20, 0
      %p47 = por %p45, %p46
      %s49 = sadd.s32 %s48, 1
      %p52 = scmp.eq.s32.totalorder %s14, 1
      %p53 = scmp.ne.s32.totalorder %s48, %s50
      %p54 = scmp.eq.s32.totalorder %s14, 0
      %p55 = por %p53, %p54
      %p56 = scmp.ne.s32.totalorder %s48, %s50
      %p57 = scmp.eq.s32.totalorder %s19, 1
      %p58 = por %p56, %p57
      %p59 = scmp.ne.s32.totalorder %s50, %s51
      %p60 = scmp.eq.s32.totalorder %s19, 0
      %p61 = por %p59, %p60
      %p62 = scmp.ne.s32.totalorder %s50, %s51
      %p63 = scmp.eq.s32.totalorder %s20, 1
      %p64 = por %p62, %p63
      %p66 = scmp.ne.s32.totalorder %s51, %s65
      %p67 = scmp.eq.s32.totalorder %s20, 0
      %p68 = por %p66, %p67
      %s70 = sadd.s32 %s69, 1
      %p73 = scmp.eq.s32.totalorder %s14, 1
      %p74 = scmp.ne.s32.totalorder %s69, %s71
      %p75 = scmp.eq.s32.totalorder %s14, 0
      %p76 = por %p74, %p75
      %p77 = scmp.ne.s32.totalorder %s69, %s71
      %p78 = scmp.eq.s32.totalorder %s19, 1
      %p79 = por %p77, %p78
      %p80 = scmp.ne.s32.totalorder %s71, %s72
      %p81 = scmp.eq.s32.totalorder %s19, 0
      %p82 = por %p80, %p81
      %p83 = scmp.ne.s32.totalorder %s71, %s72
      %p84 = scmp.eq.s32.totalorder %s20, 1
      %p85 = por %p83, %p84
      %p87 = scmp.ne.s32.totalorder %s72, %s86
      %p88 = scmp.eq.s32.totalorder %s20, 0
      %p89 = por %p87, %p88
      %s91 = sadd.s32 %s90, 1
      %p94 = scmp.eq.s32.totalorder %s14, 1
      %p95 = scmp.ne.s32.totalorder %s90, %s92
      %p96 = scmp.eq.s32.totalorder %s14, 0
      %p97 = por %p95, %p96
      %p98 = scmp.ne.s32.totalorder %s90, %s92
      %p99 = scmp.eq.s32.totalorder %s19, 1
      %p100 = por %p98, %p99
      %p101 = scmp.ne.s32.totalorder %s92, %s93
      %p102 = scmp.eq.s32.totalorder %s19, 0
      %p103 = por %p101, %p102
      %p104 = scmp.ne.s32.totalorder %s92, %s93
      %p105 = scmp.eq.s32.totalorder %s20, 1
      %p106 = por %p104, %p105
      %p108 = scmp.ne.s32.totalorder %s93, %s107
      %p109 = scmp.eq.s32.totalorder %s20, 0
      %p110 = por %p108, %p109
      %s112 = sadd.s32 %s111, 1
      %p115 = scmp.eq.s32.totalorder %s14, 1
      %p116 = scmp.ne.s32.totalorder %s111, %s113
      %p117 = scmp.eq.s32.totalorder %s14, 0
      %p118 = por %p116, %p117
      %p119 = scmp.ne.s32.totalorder %s111, %s113
      %p120 = scmp.eq.s32.totalorder %s19, 1
      %p121 = por %p119, %p120
      %p122 = scmp.ne.s32.totalorder %s113, %s114
      %p123 = scmp.eq.s32.totalorder %s19, 0
      %p124 = por %p122, %p123
      %p125 = scmp.ne.s32.totalorder %s113, %s114
      %p126 = scmp.eq.s32.totalorder %s20, 1
      %p127 = por %p125, %p126
      %p129 = scmp.ne.s32.totalorder %s114, %s128
      %p130 = scmp.eq.s32.totalorder %s20, 0
      %p131 = por %p129, %p130
      %s132 = ssub.s32 %s14, %s21
      %p133 = scmp.eq.s32.totalorder %s132, 0
      %s135 = sadd.s32 %s134, 1
      %s136 = scalar_select %p133, %s134, %s135
      %p139 = pneg %p133
      %p140 = scmp.eq.s32.totalorder %s14, 1
      %p141 = por %p139, %p140
      %p142 = scmp.ne.s32.totalorder %s134, %s137
      %p143 = scmp.eq.s32.totalorder %s14, 0
      %p144 = por %p142, %p143
      %p145 = scmp.ne.s32.totalorder %s134, %s137
      %p146 = scmp.eq.s32.totalorder %s19, 1
      %p147 = por %p145, %p146
      %p148 = scmp.ne.s32.totalorder %s137, %s138
      %p149 = scmp.eq.s32.totalorder %s19, 0
      %p150 = por %p148, %p149
      %p151 = scmp.ne.s32.totalorder %s137, %s138
      %p152 = scmp.eq.s32.totalorder %s20, 1
      %p153 = por %p151, %p152
      %p155 = scmp.ne.s32.totalorder %s138, %s154
      %p156 = scmp.eq.s32.totalorder %s20, 0
      %p157 = por %p155, %p156
      %p158 = scmp.le.s32.totalorder 1, %s14
      %p159 = scmp.lt.s32.totalorder %s14, 3
      %p160 = pnand %p158, %p159
      %p161 = pneg %p160
      // Predicated region
      $region9: #{tpu_custom_call.1} parent=5 // pred_check
        _
      $region10: #{tpu_custom_call.1} parent=5 // pred_check_branch
        %163 = sbr.rel (%p160) target = $region12
      $region11: #{tpu_custom_call.1} parent=5 // pred_region
        %s164 = ssub.s32 %s14, 1
        // Predicated region
        $region13: #{tpu_custom_call.1} parent=11 // pred_check
          %p165 = pneg %p61
        $region14: #{tpu_custom_call.1} parent=11 // pred_check_branch
          %167 = sbr.rel (%p165) target = $region16
        $region15: #{tpu_custom_call.1} parent=11 // pred_region
          _
        $region16: #{tpu_custom_call.1} parent=11 // pred_fallthru
          _
        // Predicated region
        $region17: #{tpu_custom_call.1} parent=11 // pred_check
          %p168 = pneg %p82
        $region18: #{tpu_custom_call.1} parent=11 // pred_check_branch
          %170 = sbr.rel (%p168) target = $region20
        $region19: #{tpu_custom_call.1} parent=11 // pred_region
          _
        $region20: #{tpu_custom_call.1} parent=11 // pred_fallthru
          _
        // Predicated region
        $region21: #{tpu_custom_call.1} parent=11 // pred_check
          %p171 = pneg %p103
        $region22: #{tpu_custom_call.1} parent=11 // pred_check_branch
          %173 = sbr.rel (%p171) target = $region24
        $region23: #{tpu_custom_call.1} parent=11 // pred_region
          _
        $region24: #{tpu_custom_call.1} parent=11 // pred_fallthru
          _
        // Predicated region
        $region25: #{tpu_custom_call.1} parent=11 // pred_check
          %p174 = pneg %p124
        $region26: #{tpu_custom_call.1} parent=11 // pred_check_branch
          %176 = sbr.rel (%p174) target = $region28
        $region27: #{tpu_custom_call.1} parent=11 // pred_region
          _
        $region28: #{tpu_custom_call.1} parent=11 // pred_fallthru
          _
      $region12: #{tpu_custom_call.1} parent=5 // pred_fallthru
        _
      %p177 = scmp.lt.s32.totalorder %s14, 2
      // Predicated region
      $region29: #{tpu_custom_call.1} parent=5 // pred_check
        %p178 = pneg %p177
      $region30: #{tpu_custom_call.1} parent=5 // pred_check_branch
        %180 = sbr.rel (%p178) target = $region32
      $region31: #{tpu_custom_call.1} parent=5 // pred_region
        // Predicated region
        $region33: #{tpu_custom_call.1} parent=31 // pred_check
          %p181 = pneg %p34
        $region34: #{tpu_custom_call.1} parent=31 // pred_check_branch
          %183 = sbr.rel (%p181) target = $region36
        $region35: #{tpu_custom_call.1} parent=31 // pred_region
          %p184 = scmp.lt.s32.totalorder %s14, 1
          %s185 = scalar_select %p184, %s14, 1
          %s186 = smul.addr %s185, 2
          %s187 = smul.addr %s186, 4
          %s188 = scalar_lea.vmem %s0, %s187
        $region36: #{tpu_custom_call.1} parent=31 // pred_fallthru
          _
      $region32: #{tpu_custom_call.1} parent=5 // pred_fallthru
        _
      %p189 = scmp.le.s32.totalorder 1, %s14
      %p190 = scmp.lt.s32.totalorder %s14, 3
      %p191 = pnand %p189, %p190
      %p192 = pneg %p191
      // Predicated region
      $region37: #{tpu_custom_call.1} parent=5 // pred_check
        _
      $region38: #{tpu_custom_call.1} parent=5 // pred_check_branch
        %194 = sbr.rel (%p191) target = $region40
      $region39: #{tpu_custom_call.1} parent=5 // pred_region
        %s195 = ssub.s32 %s14, 1
        %p196 = scmp.lt.s32.totalorder %s19, 1
        %s197 = scalar_select %p196, %s19, 1
        %s198 = smul.addr %s197, 2
        %s199 = smul.addr %s198, 4
        %s200 = scalar_lea.vmem %s0, %s199
        %p201 = pneg %p40
        %p202 = pneg %p37
        %p203 = pneg %p61
        %p204 = pneg %p58
        %p205 = pneg %p82
        %p206 = pneg %p79
        %p207 = pneg %p103
        %p208 = pneg %p100
        %p209 = pneg %p124
        %p210 = pneg %p121
        %p211 = pneg %p150
        %p212 = pneg %p147
        %s213 = sand.u32 %s137, 1
        %s214 = scalar_lea.sflag [#allocation3], %s213
        %s215 = sand.u32 %s137, 1
        %s216 = smul.addr %s215, 8
        %s217 = scalar_lea.vmem [#allocation2], %s216
        %p218 = scmp.lt.s32.totalorder %s19, 1
        %s219 = scalar_select %p218, %s19, 1
        %s220 = smul.addr %s219, 2
        %s221 = smul.addr %s220, 4
        %s222 = scalar_lea.vmem %s0, %s221
        %v224 = vld [vmem:[%s222] sm:$0xff]
        %v225 = vld [vmem:[%s1] sm:$0xff]
        %v226 = vld [vmem:[%s1 + $0x8] sm:$0xff]
        %v227 = vld [vmem:[%s1 + $0x10] sm:$0xff]
        %v228 = vld [vmem:[%s1 + $0x18] sm:$0xff]
        %v229 = vld [vmem:[%s1 + $0x20] sm:$0xff]
        %v230 = vld [vmem:[%s1 + $0x28] sm:$0xff]
        %v231 = vld [vmem:[%s2] sm:$0xff]
        %v232 = vld [vmem:[%s2 + $0x8] sm:$0xff]
        %v233 = vld [vmem:[%s2 + $0x10] sm:$0xff]
        %v234 = vld [vmem:[%s2 + $0x18] sm:$0xff]
        %v235 = vld [vmem:[%s2 + $0x20] sm:$0xff]
        %v236 = vld [vmem:[%s2 + $0x28] sm:$0xff]
        %238 = vset.pattern.permute.xlu0 0
        %239 = vperm.xlu0 %238, %v231
        %v240 = vpop.permute.xlu0 %239
        %243 = vset.pattern.permute.xlu0 0
        %244 = vperm.xlu0 %243, %v232
        %v245 = vpop.permute.xlu0 %244
        %248 = vset.pattern.permute.xlu0 0
        %249 = vperm.xlu0 %248, %v233
        %v250 = vpop.permute.xlu0 %249
        %253 = vset.pattern.permute.xlu0 0
        %254 = vperm.xlu0 %253, %v234
        %v255 = vpop.permute.xlu0 %254
        %258 = vset.pattern.permute.xlu0 0
        %259 = vperm.xlu0 %258, %v235
        %v260 = vpop.permute.xlu0 %259
        %263 = vset.pattern.permute.xlu0 0
        %264 = vperm.xlu0 %263, %v236
        %v265 = vpop.permute.xlu0 %264
        %v268 = vcombine.high %v224, %v224
        %vm269 = vcmask 31744
        %v271 = vsel %vm269, %v225, 0
        %v274 = vsel %vm269, %v226, 0
        %v277 = vsel %vm269, %v227, 0
        %v280 = vsel %vm269, %v228, 0
        %v283 = vsel %vm269, %v229, 0
        %v286 = vsel %vm269, %v230, 0
        %vm288 = vcmask 1043456
        %v289 = vsel %vm288, %v224, 0
        %v291 = vsel %vm288, %v268, 0
        %293 = vmatprep.subr.mxu0 0.0
        %294 = vmatpush1.msra.mxu0 0.0
        %295 = vmatprep.subr.mxu0 0.0
        %296 = vmatpush1.msra.mxu0 0.0
        %297 = vmatprep.subr.mxu0 0.0
        %298 = vmatpush1.msra.mxu0 0.0
        %299 = vmatprep.subr.mxu0 0.0
        %300 = vmatpush1.msra.mxu0 0.0
        %301 = vmatprep.subr.mxu0 0.0
        %302 = vmatpush1.msra.mxu0 0.0
        %303 = vmatprep.subr.mxu0 0.0
        %304 = vmatpush1.msra.mxu0 0.0
        %305 = vmatprep.subr.mxu0 0.0
        %306 = vmatpush1.msra.mxu0 0.0
        %307 = vmatprep.subr.mxu0 0.0
        %308 = vmatpush1.msra.mxu0 0.0
        %309 = vmatprep.subr.mxu0 0.0
        %310 = vmatpush1.msra.mxu0 0.0
        %311 = vmatprep.subr.mxu0 0.0
        %312 = vmatpush1.msra.mxu0 0.0
        %313 = vmatprep.subr.mxu0 0.0
        %314 = vmatpush1.msra.mxu0 0.0
        %315 = vmatprep.subr.mxu0 0.0
        %316 = vmatpush1.msra.mxu0 0.0
        %317 = vmatprep.subr.mxu0 0.0
        %318 = vmatpush1.msra.mxu0 0.0
        %319 = vmatprep.subr.mxu0 0.0
        %320 = vmatpush1.msra.mxu0 0.0
        %321 = vmatprep.subr.mxu0 0.0
        %322 = vmatpush1.msra.mxu0 0.0
        %323 = vmatprep.subr.mxu0 %v291
        %324 = vmatpush1.msra.mxu0 %v289
        %325 = vmatprep.subr.mxu0 0.0
        %326 = vmatpush2.msra.mxu0 0.0
        %327 = vmatprep.subr.mxu0 0.0
        %328 = vmatpush2.msra.mxu0 0.0
        %329 = vmatprep.subr.mxu0 0.0
        %330 = vmatpush2.msra.mxu0 0.0
        %331 = vmatprep.subr.mxu0 0.0
        %332 = vmatpush2.msra.mxu0 0.0
        %333 = vmatprep.subr.mxu0 0.0
        %334 = vmatpush2.msra.mxu0 0.0
        %335 = vmatprep.subr.mxu0 0.0
        %336 = vmatpush2.msra.mxu0 0.0
        %337 = vmatprep.subr.mxu0 0.0
        %338 = vmatpush2.msra.mxu0 0.0
        %339 = vmatprep.subr.mxu0 0.0
        %340 = vmatpush2.msra.mxu0 0.0
        %341 = vmatprep.subr.mxu0 0.0
        %342 = vmatpush2.msra.mxu0 0.0
        %343 = vmatprep.subr.mxu0 0.0
        %344 = vmatpush2.msra.mxu0 0.0
        %345 = vmatprep.subr.mxu0 0.0
        %346 = vmatpush2.msra.mxu0 0.0
        %347 = vmatprep.subr.mxu0 0.0
        %348 = vmatpush2.msra.mxu0 0.0
        %349 = vmatprep.subr.mxu0 0.0
        %350 = vmatpush2.msra.mxu0 0.0
        %351 = vmatprep.subr.mxu0 0.0
        %352 = vmatpush2.msra.mxu0 0.0
        %353 = vmatprep.subr.mxu0 0.0
        %354 = vmatpush2.msra.mxu0 0.0
        %355 = vmatprep.subr.mxu0 0.0
        %356 = vmatpush2.msra.mxu0 0.0
        %357 = vmatprep.mubr.f32.mxu0 0.0
        %358 = vmatmul.mubr.f32.gmra.mxu0 %v271
        %v359 = vpop.f32.mrf.mxu0
        %v360 = vadd.f32 %v240, %v359
        %v361 = vpop.f32.mrf.mxu0
        %v362 = vadd.f32 %v240, %v361
        %363 = vmatprep.mubr.f32.mxu0 0.0
        %364 = vmatmul.mubr.f32.gmra.mxu0 %v274
        %v365 = vpop.f32.mrf.mxu0
        %v366 = vadd.f32 %v245, %v365
        %v367 = vpop.f32.mrf.mxu0
        %v368 = vadd.f32 %v245, %v367
        %369 = vmatprep.mubr.f32.mxu0 0.0
        %370 = vmatmul.mubr.f32.gmra.mxu0 %v277
        %v371 = vpop.f32.mrf.mxu0
        %v372 = vadd.f32 %v250, %v371
        %v373 = vpop.f32.mrf.mxu0
        %v374 = vadd.f32 %v250, %v373
        %375 = vmatprep.mubr.f32.mxu0 0.0
        %376 = vmatmul.mubr.f32.gmra.mxu0 %v280
        %v377 = vpop.f32.mrf.mxu0
        %v378 = vadd.f32 %v255, %v377
        %v379 = vpop.f32.mrf.mxu0
        %v380 = vadd.f32 %v255, %v379
        %381 = vmatprep.mubr.f32.mxu0 0.0
        %382 = vmatmul.mubr.f32.gmra.mxu0 %v283
        %v383 = vpop.f32.mrf.mxu0
        %v384 = vadd.f32 %v260, %v383
        %v385 = vpop.f32.mrf.mxu0
        %v386 = vadd.f32 %v260, %v385
        %387 = vmatprep.mubr.f32.mxu0 0.0
        %388 = vmatmul.mubr.f32.gmra.mxu0 %v286
        %v389 = vpop.f32.mrf.mxu0
        %v390 = vadd.f32 %v265, %v389
        %v391 = vpop.f32.mrf.mxu0
        %v392 = vadd.f32 %v265, %v391
        %393 = vdwg.mxu0
        %v394 = vpack.c.bf16 %v372, %v372
        %v395 = vpack.c.bf16 %v374, %v374
        %v396 = vpack.c.bf16 %v360, %v360
        %v397 = vpack.c.bf16 %v362, %v362
        %398 = vxpose.xlu0.c.b16.start [1/8] %v394, 128
        %399 = vxpose.xlu0.c.b16.cont [2/8] 0, 128
        %400 = vxpose.xlu0.c.b16.cont [3/8] 0, 128
        %401 = vxpose.xlu0.c.b16.cont [4/8] 0, 128
        %402 = vxpose.xlu0.c.b16.cont [5/8] 0, 128
        %403 = vxpose.xlu0.c.b16.cont [6/8] 0, 128
        %404 = vxpose.xlu0.c.b16.cont [7/8] 0, 128
        %405 = vxpose.xlu0.c.b16.end [8/8] 0, 128
        %v406 = vpop.trf.xlu0
        %v407 = vpop.trf.xlu0
        %v408 = vpop.trf.xlu0
        %v409 = vpop.trf.xlu0
        %v410 = vpop.trf.xlu0
        %v411 = vpop.trf.xlu0
        %v412 = vpop.trf.xlu0
        %v413 = vpop.trf.xlu0
        %414 = vxpose.xlu0.c.b16.start [1/8] %v395, 128
        %415 = vxpose.xlu0.c.b16.cont [2/8] 0, 128
        %416 = vxpose.xlu0.c.b16.cont [3/8] 0, 128
        %417 = vxpose.xlu0.c.b16.cont [4/8] 0, 128
        %418 = vxpose.xlu0.c.b16.cont [5/8] 0, 128
        %419 = vxpose.xlu0.c.b16.cont [6/8] 0, 128
        %420 = vxpose.xlu0.c.b16.cont [7/8] 0, 128
        %421 = vxpose.xlu0.c.b16.end [8/8] 0, 128
        %v422 = vpop.trf.xlu0
        %v423 = vpop.trf.xlu0
        %v424 = vpop.trf.xlu0
        %v425 = vpop.trf.xlu0
        %v426 = vpop.trf.xlu0
        %v427 = vpop.trf.xlu0
        %v428 = vpop.trf.xlu0
        %v429 = vpop.trf.xlu0
        %vm430 = vcmask 64512
        %v432 = vsel %vm430, %v406, 0
        %v435 = vsel %vm430, %v407, 0
        %v438 = vsel %vm430, %v408, 0
        %v441 = vsel %vm430, %v409, 0
        %v444 = vsel %vm430, %v410, 0
        %v447 = vsel %vm430, %v411, 0
        %v450 = vsel %vm430, %v412, 0
        %v453 = vsel %vm430, %v413, 0
        %v456 = vsel %vm430, %v422, 0
        %v459 = vsel %vm430, %v423, 0
        %v462 = vsel %vm430, %v424, 0
        %v465 = vsel %vm430, %v425, 0
        %v468 = vsel %vm430, %v426, 0
        %v471 = vsel %vm430, %v427, 0
        %v474 = vsel %vm430, %v428, 0
        %v477 = vsel %vm430, %v429, 0
        %v480 = vsel %vm288, %v396, 0
        %v483 = vsel %vm288, %v397, 0
        %485 = vmatprep.subr.bf16.mxu0 0
        %486 = vmatpush1.bf16.msra.mxu0 0
        %487 = vmatprep.subr.bf16.mxu0 0
        %488 = vmatpush1.bf16.msra.mxu0 0
        %489 = vmatprep.subr.bf16.mxu0 0
        %490 = vmatpush1.bf16.msra.mxu0 0
        %491 = vmatprep.subr.bf16.mxu0 0
        %492 = vmatpush1.bf16.msra.mxu0 0
        %493 = vmatprep.subr.bf16.mxu0 0
        %494 = vmatpush1.bf16.msra.mxu0 0
        %495 = vmatprep.subr.bf16.mxu0 0
        %496 = vmatpush1.bf16.msra.mxu0 0
        %497 = vmatprep.subr.bf16.mxu0 0
        %498 = vmatpush1.bf16.msra.mxu0 0
        %499 = vmatprep.subr.bf16.mxu0 %v483
        %500 = vmatpush1.bf16.msra.mxu0 %v480
        %501 = vmatprep.subr.bf16.mxu0 0
        %502 = vmatpush2.bf16.msra.mxu0 0
        %503 = vmatprep.subr.bf16.mxu0 0
        %504 = vmatpush2.bf16.msra.mxu0 0
        %505 = vmatprep.subr.bf16.mxu0 0
        %506 = vmatpush2.bf16.msra.mxu0 0
        %507 = vmatprep.subr.bf16.mxu0 0
        %508 = vmatpush2.bf16.msra.mxu0 0
        %509 = vmatprep.subr.bf16.mxu0 0
        %510 = vmatpush2.bf16.msra.mxu0 0
        %511 = vmatprep.subr.bf16.mxu0 0
        %512 = vmatpush2.bf16.msra.mxu0 0
        %513 = vmatprep.subr.bf16.mxu0 0
        %514 = vmatpush2.bf16.msra.mxu0 0
        %515 = vmatprep.subr.bf16.mxu0 0
        %516 = vmatpush2.bf16.msra.mxu0 0
        %517 = vmatprep.mubr.bf16.mxu0 0
        %518 = vmatmul.mubr.bf16.gmra.mxu0 %v432
        %v519 = vpop.f32.mrf.mxu0
        %v520 = vadd.f32 0.0, %v519
        %v521 = vpop.f32.mrf.mxu0
        %v522 = vadd.f32 0.0, %v521
        %v523 = vpop.f32.mrf.mxu0
        %v524 = vadd.f32 0.0, %v523
        %v525 = vpop.f32.mrf.mxu0
        %v526 = vadd.f32 0.0, %v525
        %527 = vmatprep.mubr.bf16.mxu0 0
        %528 = vmatmul.mubr.bf16.gmra.mxu0 %v435
        %v529 = vpop.f32.mrf.mxu0
        %v530 = vadd.f32 0.0, %v529
        %v531 = vpop.f32.mrf.mxu0
        %v532 = vadd.f32 0.0, %v531
        %v533 = vpop.f32.mrf.mxu0
        %v534 = vadd.f32 0.0, %v533
        %v535 = vpop.f32.mrf.mxu0
        %v536 = vadd.f32 0.0, %v535
        %537 = vmatprep.mubr.bf16.mxu0 0
        %538 = vmatmul.mubr.bf16.gmra.mxu0 %v438
        %v539 = vpop.f32.mrf.mxu0
        %v540 = vadd.f32 0.0, %v539
        %v541 = vpop.f32.mrf.mxu0
        %v542 = vadd.f32 0.0, %v541
        %v543 = vpop.f32.mrf.mxu0
        %v544 = vadd.f32 0.0, %v543
        %v545 = vpop.f32.mrf.mxu0
        %v546 = vadd.f32 0.0, %v545
        %547 = vmatprep.mubr.bf16.mxu0 0
        %548 = vmatmul.mubr.bf16.gmra.mxu0 %v441
        %v549 = vpop.f32.mrf.mxu0
        %v550 = vadd.f32 0.0, %v549
        %v551 = vpop.f32.mrf.mxu0
        %v552 = vadd.f32 0.0, %v551
        %v553 = vpop.f32.mrf.mxu0
        %v554 = vadd.f32 0.0, %v553
        %v555 = vpop.f32.mrf.mxu0
        %v556 = vadd.f32 0.0, %v555
        %557 = vmatprep.mubr.bf16.mxu0 0
        %558 = vmatmul.mubr.bf16.gmra.mxu0 %v444
        %v559 = vpop.f32.mrf.mxu0
        %v560 = vadd.f32 0.0, %v559
        %v561 = vpop.f32.mrf.mxu0
        %v562 = vadd.f32 0.0, %v561
        %v563 = vpop.f32.mrf.mxu0
        %v564 = vadd.f32 0.0, %v563
        %v565 = vpop.f32.mrf.mxu0
        %v566 = vadd.f32 0.0, %v565
        %567 = vmatprep.mubr.bf16.mxu0 0
        %568 = vmatmul.mubr.bf16.gmra.mxu0 %v447
        %v569 = vpop.f32.mrf.mxu0
        %v570 = vadd.f32 0.0, %v569
        %v571 = vpop.f32.mrf.mxu0
        %v572 = vadd.f32 0.0, %v571
        %v573 = vpop.f32.mrf.mxu0
        %v574 = vadd.f32 0.0, %v573
        %v575 = vpop.f32.mrf.mxu0
        %v576 = vadd.f32 0.0, %v575
        %577 = vmatprep.mubr.bf16.mxu0 0
        %578 = vmatmul.mubr.bf16.gmra.mxu0 %v450
        %v579 = vpop.f32.mrf.mxu0
        %v580 = vadd.f32 0.0, %v579
        %v581 = vpop.f32.mrf.mxu0
        %v582 = vadd.f32 0.0, %v581
        %v583 = vpop.f32.mrf.mxu0
        %v584 = vadd.f32 0.0, %v583
        %v585 = vpop.f32.mrf.mxu0
        %v586 = vadd.f32 0.0, %v585
        %587 = vmatprep.mubr.bf16.mxu0 0
        %588 = vmatmul.mubr.bf16.gmra.mxu0 %v453
        %v589 = vpop.f32.mrf.mxu0
        %v590 = vadd.f32 0.0, %v589
        %v591 = vpop.f32.mrf.mxu0
        %v592 = vadd.f32 0.0, %v591
        %v593 = vpop.f32.mrf.mxu0
        %v594 = vadd.f32 0.0, %v593
        %v595 = vpop.f32.mrf.mxu0
        %v596 = vadd.f32 0.0, %v595
        %597 = vmatprep.mubr.bf16.mxu0 0
        %598 = vmatmul.mubr.bf16.gmra.mxu0 %v456
        %v599 = vpop.f32.mrf.mxu0
        %v600 = vadd.f32 0.0, %v599
        %v601 = vpop.f32.mrf.mxu0
        %v602 = vadd.f32 0.0, %v601
        %v603 = vpop.f32.mrf.mxu0
        %v604 = vadd.f32 0.0, %v603
        %v605 = vpop.f32.mrf.mxu0
        %v606 = vadd.f32 0.0, %v605
        %607 = vmatprep.mubr.bf16.mxu0 0
        %608 = vmatmul.mubr.bf16.gmra.mxu0 %v459
        %v609 = vpop.f32.mrf.mxu0
        %v610 = vadd.f32 0.0, %v609
        %v611 = vpop.f32.mrf.mxu0
        %v612 = vadd.f32 0.0, %v611
        %v613 = vpop.f32.mrf.mxu0
        %v614 = vadd.f32 0.0, %v613
        %v615 = vpop.f32.mrf.mxu0
        %v616 = vadd.f32 0.0, %v615
        %617 = vmatprep.mubr.bf16.mxu0 0
        %618 = vmatmul.mubr.bf16.gmra.mxu0 %v462
        %v619 = vpop.f32.mrf.mxu0
        %v620 = vadd.f32 0.0, %v619
        %v621 = vpop.f32.mrf.mxu0
        %v622 = vadd.f32 0.0, %v621
        %v623 = vpop.f32.mrf.mxu0
        %v624 = vadd.f32 0.0, %v623
        %v625 = vpop.f32.mrf.mxu0
        %v626 = vadd.f32 0.0, %v625
        %627 = vmatprep.mubr.bf16.mxu0 0
        %628 = vmatmul.mubr.bf16.gmra.mxu0 %v465
        %v629 = vpop.f32.mrf.mxu0
        %v630 = vadd.f32 0.0, %v629
        %v631 = vpop.f32.mrf.mxu0
        %v632 = vadd.f32 0.0, %v631
        %v633 = vpop.f32.mrf.mxu0
        %v634 = vadd.f32 0.0, %v633
        %v635 = vpop.f32.mrf.mxu0
        %v636 = vadd.f32 0.0, %v635
        %637 = vmatprep.mubr.bf16.mxu0 0
        %638 = vmatmul.mubr.bf16.gmra.mxu0 %v468
        %v639 = vpop.f32.mrf.mxu0
        %v640 = vadd.f32 0.0, %v639
        %v641 = vpop.f32.mrf.mxu0
        %v642 = vadd.f32 0.0, %v641
        %v643 = vpop.f32.mrf.mxu0
        %v644 = vadd.f32 0.0, %v643
        %v645 = vpop.f32.mrf.mxu0
        %v646 = vadd.f32 0.0, %v645
        %647 = vmatprep.mubr.bf16.mxu0 0
        %648 = vmatmul.mubr.bf16.gmra.mxu0 %v471
        %v649 = vpop.f32.mrf.mxu0
        %v650 = vadd.f32 0.0, %v649
        %v651 = vpop.f32.mrf.mxu0
        %v652 = vadd.f32 0.0, %v651
        %v653 = vpop.f32.mrf.mxu0
        %v654 = vadd.f32 0.0, %v653
        %v655 = vpop.f32.mrf.mxu0
        %v656 = vadd.f32 0.0, %v655
        %657 = vmatprep.mubr.bf16.mxu0 0
        %658 = vmatmul.mubr.bf16.gmra.mxu0 %v474
        %v659 = vpop.f32.mrf.mxu0
        %v660 = vadd.f32 0.0, %v659
        %v661 = vpop.f32.mrf.mxu0
        %v662 = vadd.f32 0.0, %v661
        %v663 = vpop.f32.mrf.mxu0
        %v664 = vadd.f32 0.0, %v663
        %v665 = vpop.f32.mrf.mxu0
        %v666 = vadd.f32 0.0, %v665
        %667 = vmatprep.mubr.bf16.mxu0 0
        %668 = vmatmul.mubr.bf16.gmra.mxu0 %v477
        %v669 = vpop.f32.mrf.mxu0
        %v670 = vadd.f32 0.0, %v669
        %v671 = vpop.f32.mrf.mxu0
        %v672 = vadd.f32 0.0, %v671
        %v673 = vpop.f32.mrf.mxu0
        %v674 = vadd.f32 0.0, %v673
        %v675 = vpop.f32.mrf.mxu0
        %v676 = vadd.f32 0.0, %v675
        %677 = vdwg.mxu0
        %v678 = vmax.f32 %v520, %v530
        %v679 = vmax.f32 %v524, %v534
        %v680 = vmax.f32 %v678, %v540
        %v681 = vmax.f32 %v679, %v544
        %v682 = vmax.f32 %v680, %v550
        %v683 = vmax.f32 %v681, %v554
        %v684 = vmax.f32 %v682, %v560
        %v685 = vmax.f32 %v683, %v564
        %v686 = vmax.f32 %v684, %v570
        %v687 = vmax.f32 %v685, %v574
        %v688 = vmax.f32 %v686, %v580
        %v689 = vmax.f32 %v687, %v584
        %v690 = vmax.f32 %v688, %v590
        %v691 = vmax.f32 %v689, %v594
        %v692 = vmax.f32 %v690, %v600
        %v693 = vmax.f32 %v691, %v604
        %v694 = vmax.f32 %v692, %v610
        %v695 = vmax.f32 %v693, %v614
        %v696 = vmax.f32 %v694, %v620
        %v697 = vmax.f32 %v695, %v624
        %v698 = vmax.f32 %v696, %v630
        %v699 = vmax.f32 %v697, %v634
        %v700 = vmax.f32 %v698, %v640
        %v701 = vmax.f32 %v699, %v644
        %v702 = vmax.f32 %v700, %v650
        %v703 = vmax.f32 %v701, %v654
        %v704 = vmax.f32 %v702, %v660
        %v705 = vmax.f32 %v703, %v664
        %v706 = vmax.f32 %v704, %v670
        %v707 = vmax.f32 %v705, %v674
        %v708 = vmax.f32 %v706, %v707
        %v709 = vrot.slane %v708, 4
        %v710 = vmax.f32 %v708, %v709
        %v711 = vrot.slane %v710, 2
        %v712 = vmax.f32 %v710, %v711
        %v713 = vrot.slane %v712, 1
        %v714 = vmax.f32 %v712, %v713
        %v715 = vmax.f32 %v522, %v532
        %v716 = vmax.f32 %v526, %v536
        %v717 = vmax.f32 %v715, %v542
        %v718 = vmax.f32 %v716, %v546
        %v719 = vmax.f32 %v717, %v552
        %v720 = vmax.f32 %v718, %v556
        %v721 = vmax.f32 %v719, %v562
        %v722 = vmax.f32 %v720, %v566
        %v723 = vmax.f32 %v721, %v572
        %v724 = vmax.f32 %v722, %v576
        %v725 = vmax.f32 %v723, %v582
        %v726 = vmax.f32 %v724, %v586
        %v727 = vmax.f32 %v725, %v592
        %v728 = vmax.f32 %v726, %v596
        %v729 = vmax.f32 %v727, %v602
        %v730 = vmax.f32 %v728, %v606
        %v731 = vmax.f32 %v729, %v612
        %v732 = vmax.f32 %v730, %v616
        %v733 = vmax.f32 %v731, %v622
        %v734 = vmax.f32 %v732, %v626
        %v735 = vmax.f32 %v733, %v632
        %v736 = vmax.f32 %v734, %v636
        %v737 = vmax.f32 %v735, %v642
        %v738 = vmax.f32 %v736, %v646
        %v739 = vmax.f32 %v737, %v652
        %v740 = vmax.f32 %v738, %v656
        %v741 = vmax.f32 %v739, %v662
        %v742 = vmax.f32 %v740, %v666
        %v743 = vmax.f32 %v741, %v672
        %v744 = vmax.f32 %v742, %v676
        %v745 = vmax.f32 %v743, %v744
        %v746 = vrot.slane %v745, 4
        %v747 = vmax.f32 %v745, %v746
        %v748 = vrot.slane %v747, 2
        %v749 = vmax.f32 %v747, %v748
        %v750 = vrot.slane %v749, 1
        %v751 = vmax.f32 %v749, %v750
        %v752 = vsub.f32 %v520, %v714
        %v753 = vsub.f32 %v522, %v751
        %v754 = vsub.f32 %v524, %v714
        %v755 = vsub.f32 %v526, %v751
        %v756 = vsub.f32 %v530, %v714
        %v757 = vsub.f32 %v532, %v751
        %v758 = vsub.f32 %v534, %v714
        %v759 = vsub.f32 %v536, %v751
        %v760 = vsub.f32 %v540, %v714
        %v761 = vsub.f32 %v542, %v751
        %v762 = vsub.f32 %v544, %v714
        %v763 = vsub.f32 %v546, %v751
        %v764 = vsub.f32 %v550, %v714
        %v765 = vsub.f32 %v552, %v751
        %v766 = vsub.f32 %v554, %v714
        %v767 = vsub.f32 %v556, %v751
        %v768 = vsub.f32 %v560, %v714
        %v769 = vsub.f32 %v562, %v751
        %v770 = vsub.f32 %v564, %v714
        %v771 = vsub.f32 %v566, %v751
        %v772 = vsub.f32 %v570, %v714
        %v773 = vsub.f32 %v572, %v751
        %v774 = vsub.f32 %v574, %v714
        %v775 = vsub.f32 %v576, %v751
        %v776 = vsub.f32 %v580, %v714
        %v777 = vsub.f32 %v582, %v751
        %v778 = vsub.f32 %v584, %v714
        %v779 = vsub.f32 %v586, %v751
        %v780 = vsub.f32 %v590, %v714
        %v781 = vsub.f32 %v592, %v751
        %v782 = vsub.f32 %v594, %v714
        %v783 = vsub.f32 %v596, %v751
        %v784 = vsub.f32 %v600, %v714
        %v785 = vsub.f32 %v602, %v751
        %v786 = vsub.f32 %v604, %v714
        %v787 = vsub.f32 %v606, %v751
        %v788 = vsub.f32 %v610, %v714
        %v789 = vsub.f32 %v612, %v751
        %v790 = vsub.f32 %v614, %v714
        %v791 = vsub.f32 %v616, %v751
        %v792 = vsub.f32 %v620, %v714
        %v793 = vsub.f32 %v622, %v751
        %v794 = vsub.f32 %v624, %v714
        %v795 = vsub.f32 %v626, %v751
        %v796 = vsub.f32 %v630, %v714
        %v797 = vsub.f32 %v632, %v751
        %v798 = vsub.f32 %v634, %v714
        %v799 = vsub.f32 %v636, %v751
        %v800 = vsub.f32 %v640, %v714
        %v801 = vsub.f32 %v642, %v751
        %v802 = vsub.f32 %v644, %v714
        %v803 = vsub.f32 %v646, %v751
        %v804 = vsub.f32 %v650, %v714
        %v805 = vsub.f32 %v652, %v751
        %v806 = vsub.f32 %v654, %v714
        %v807 = vsub.f32 %v656, %v751
        %v808 = vsub.f32 %v660, %v714
        %v809 = vsub.f32 %v662, %v751
        %v810 = vsub.f32 %v664, %v714
        %v811 = vsub.f32 %v666, %v751
        %v812 = vsub.f32 %v670, %v714
        %v813 = vsub.f32 %v672, %v751
        %v814 = vsub.f32 %v674, %v714
        %v815 = vsub.f32 %v676, %v751
        %v816 = vmul.f32 %v752, 1.442695
        %v817 = vpow.pop %v816
        %v818 = vmul.f32 %v753, 1.442695
        %v819 = vpow.pop %v818
        %v820 = vmul.f32 %v754, 1.442695
        %v821 = vpow.pop %v820
        %v822 = vmul.f32 %v755, 1.442695
        %v823 = vpow.pop %v822
        %v824 = vmul.f32 %v756, 1.442695
        %v825 = vpow.pop %v824
        %v826 = vmul.f32 %v757, 1.442695
        %v827 = vpow.pop %v826
        %v828 = vmul.f32 %v758, 1.442695
        %v829 = vpow.pop %v828
        %v830 = vmul.f32 %v759, 1.442695
        %v831 = vpow.pop %v830
        %v832 = vmul.f32 %v760, 1.442695
        %v833 = vpow.pop %v832
        %v834 = vmul.f32 %v761, 1.442695
        %v835 = vpow.pop %v834
        %v836 = vmul.f32 %v762, 1.442695
        %v837 = vpow.pop %v836
        %v838 = vmul.f32 %v763, 1.442695
        %v839 = vpow.pop %v838
        %v840 = vmul.f32 %v764, 1.442695
        %v841 = vpow.pop %v840
        %v842 = vmul.f32 %v765, 1.442695
        %v843 = vpow.pop %v842
        %v844 = vmul.f32 %v766, 1.442695
        %v845 = vpow.pop %v844
        %v846 = vmul.f32 %v767, 1.442695
        %v847 = vpow.pop %v846
        %v848 = vmul.f32 %v768, 1.442695
        %v849 = vpow.pop %v848
        %v850 = vmul.f32 %v769, 1.442695
        %v851 = vpow.pop %v850
        %v852 = vmul.f32 %v770, 1.442695
        %v853 = vpow.pop %v852
        %v854 = vmul.f32 %v771, 1.442695
        %v855 = vpow.pop %v854
        %v856 = vmul.f32 %v772, 1.442695
        %v857 = vpow.pop %v856
        %v858 = vmul.f32 %v773, 1.442695
        %v859 = vpow.pop %v858
        %v860 = vmul.f32 %v774, 1.442695
        %v861 = vpow.pop %v860
        %v862 = vmul.f32 %v775, 1.442695
        %v863 = vpow.pop %v862
        %v864 = vmul.f32 %v776, 1.442695
        %v865 = vpow.pop %v864
        %v866 = vmul.f32 %v777, 1.442695
        %v867 = vpow.pop %v866
        %v868 = vmul.f32 %v778, 1.442695
        %v869 = vpow.pop %v868
        %v870 = vmul.f32 %v779, 1.442695
        %v871 = vpow.pop %v870
        %v872 = vmul.f32 %v780, 1.442695
        %v873 = vpow.pop %v872
        %v874 = vmul.f32 %v781, 1.442695
        %v875 = vpow.pop %v874
        %v876 = vmul.f32 %v782, 1.442695
        %v877 = vpow.pop %v876
        %v878 = vmul.f32 %v783, 1.442695
        %v879 = vpow.pop %v878
        %v880 = vmul.f32 %v784, 1.442695
        %v881 = vpow.pop %v880
        %v882 = vmul.f32 %v785, 1.442695
        %v883 = vpow.pop %v882
        %v884 = vmul.f32 %v786, 1.442695
        %v885 = vpow.pop %v884
        %v886 = vmul.f32 %v787, 1.442695
        %v887 = vpow.pop %v886
        %v888 = vmul.f32 %v788, 1.442695
        %v889 = vpow.pop %v888
        %v890 = vmul.f32 %v789, 1.442695
        %v891 = vpow.pop %v890
        %v892 = vmul.f32 %v790, 1.442695
        %v893 = vpow.pop %v892
        %v894 = vmul.f32 %v791, 1.442695
        %v895 = vpow.pop %v894
        %v896 = vmul.f32 %v792, 1.442695
        %v897 = vpow.pop %v896
        %v898 = vmul.f32 %v793, 1.442695
        %v899 = vpow.pop %v898
        %v900 = vmul.f32 %v794, 1.442695
        %v901 = vpow.pop %v900
        %v902 = vmul.f32 %v795, 1.442695
        %v903 = vpow.pop %v902
        %v904 = vmul.f32 %v796, 1.442695
        %v905 = vpow.pop %v904
        %v906 = vmul.f32 %v797, 1.442695
        %v907 = vpow.pop %v906
        %v908 = vmul.f32 %v798, 1.442695
        %v909 = vpow.pop %v908
        %v910 = vmul.f32 %v799, 1.442695
        %v911 = vpow.pop %v910
        %v912 = vmul.f32 %v800, 1.442695
        %v913 = vpow.pop %v912
        %v914 = vmul.f32 %v801, 1.442695
        %v915 = vpow.pop %v914
        %v916 = vmul.f32 %v802, 1.442695
        %v917 = vpow.pop %v916
        %v918 = vmul.f32 %v803, 1.442695
        %v919 = vpow.pop %v918
        %v920 = vmul.f32 %v804, 1.442695
        %v921 = vpow.pop %v920
        %v922 = vmul.f32 %v805, 1.442695
        %v923 = vpow.pop %v922
        %v924 = vmul.f32 %v806, 1.442695
        %v925 = vpow.pop %v924
        %v926 = vmul.f32 %v807, 1.442695
        %v927 = vpow.pop %v926
        %v928 = vmul.f32 %v808, 1.442695
        %v929 = vpow.pop %v928
        %v930 = vmul.f32 %v809, 1.442695
        %v931 = vpow.pop %v930
        %v932 = vmul.f32 %v810, 1.442695
        %v933 = vpow.pop %v932
        %v934 = vmul.f32 %v811, 1.442695
        %v935 = vpow.pop %v934
        %v936 = vmul.f32 %v812, 1.442695
        %v937 = vpow.pop %v936
        %v938 = vmul.f32 %v813, 1.442695
        %v939 = vpow.pop %v938
        %v940 = vmul.f32 %v814, 1.442695
        %v941 = vpow.pop %v940
        %v942 = vmul.f32 %v815, 1.442695
        %v943 = vpow.pop %v942
        %v944 = vadd.f32 %v817, %v821
        %v945 = vadd.f32 %v944, %v825
        %v946 = vadd.f32 %v945, %v829
        %v947 = vadd.f32 %v946, %v833
        %v948 = vadd.f32 %v947, %v837
        %v949 = vadd.f32 %v948, %v841
        %v950 = vadd.f32 %v949, %v845
        %v951 = vadd.f32 %v950, %v849
        %v952 = vadd.f32 %v951, %v853
        %v953 = vadd.f32 %v952, %v857
        %v954 = vadd.f32 %v953, %v861
        %v955 = vadd.f32 %v954, %v865
        %v956 = vadd.f32 %v955, %v869
        %v957 = vadd.f32 %v956, %v873
        %v958 = vadd.f32 %v957, %v877
        %v959 = vadd.f32 %v958, %v881
        %v960 = vadd.f32 %v959, %v885
        %v961 = vadd.f32 %v960, %v889
        %v962 = vadd.f32 %v961, %v893
        %v963 = vadd.f32 %v962, %v897
        %v964 = vadd.f32 %v963, %v901
        %v965 = vadd.f32 %v964, %v905
        %v966 = vadd.f32 %v965, %v909
        %v967 = vadd.f32 %v966, %v913
        %v968 = vadd.f32 %v967, %v917
        %v969 = vadd.f32 %v968, %v921
        %v970 = vadd.f32 %v969, %v925
        %v971 = vadd.f32 %v970, %v929
        %v972 = vadd.f32 %v971, %v933
        %v973 = vadd.f32 %v972, %v937
        %v974 = vadd.f32 %v973, %v941
        %v975 = vrot.slane %v974, 4
        %v976 = vadd.f32 %v974, %v975
        %v977 = vrot.slane %v976, 2
        %v978 = vadd.f32 %v976, %v977
        %v979 = vrot.slane %v978, 1
        %v980 = vadd.f32 %v978, %v979
        %v981 = vadd.f32 %v819, %v823
        %v982 = vadd.f32 %v981, %v827
        %v983 = vadd.f32 %v982, %v831
        %v984 = vadd.f32 %v983, %v835
        %v985 = vadd.f32 %v984, %v839
        %v986 = vadd.f32 %v985, %v843
        %v987 = vadd.f32 %v986, %v847
        %v988 = vadd.f32 %v987, %v851
        %v989 = vadd.f32 %v988, %v855
        %v990 = vadd.f32 %v989, %v859
        %v991 = vadd.f32 %v990, %v863
        %v992 = vadd.f32 %v991, %v867
        %v993 = vadd.f32 %v992, %v871
        %v994 = vadd.f32 %v993, %v875
        %v995 = vadd.f32 %v994, %v879
        %v996 = vadd.f32 %v995, %v883
        %v997 = vadd.f32 %v996, %v887
        %v998 = vadd.f32 %v997, %v891
        %v999 = vadd.f32 %v998, %v895
        %v1000 = vadd.f32 %v999, %v899
        %v1001 = vadd.f32 %v1000, %v903
        %v1002 = vadd.f32 %v1001, %v907
        %v1003 = vadd.f32 %v1002, %v911
        %v1004 = vadd.f32 %v1003, %v915
        %v1005 = vadd.f32 %v1004, %v919
        %v1006 = vadd.f32 %v1005, %v923
        %v1007 = vadd.f32 %v1006, %v927
        %v1008 = vadd.f32 %v1007, %v931
        %v1009 = vadd.f32 %v1008, %v935
        %v1010 = vadd.f32 %v1009, %v939
        %v1011 = vadd.f32 %v1010, %v943
        %v1012 = vrot.slane %v1011, 4
        %v1013 = vadd.f32 %v1011, %v1012
        %v1014 = vrot.slane %v1013, 2
        %v1015 = vadd.f32 %v1013, %v1014
        %v1016 = vrot.slane %v1015, 1
        %v1017 = vadd.f32 %v1015, %v1016
        %v1018 = vpack.c.bf16 %v378, %v378
        %v1019 = vpack.c.bf16 %v380, %v380
        %v1020 = vpack.c.bf16 %v821, %v817
        %v1021 = vpack.c.bf16 %v823, %v819
        %v1022 = vpack.c.bf16 %v829, %v825
        %v1023 = vpack.c.bf16 %v831, %v827
        %v1024 = vpack.c.bf16 %v837, %v833
        %v1025 = vpack.c.bf16 %v839, %v835
        %v1026 = vpack.c.bf16 %v845, %v841
        %v1027 = vpack.c.bf16 %v847, %v843
        %v1028 = vpack.c.bf16 %v853, %v849
        %v1029 = vpack.c.bf16 %v855, %v851
        %v1030 = vpack.c.bf16 %v861, %v857
        %v1031 = vpack.c.bf16 %v863, %v859
        %v1032 = vpack.c.bf16 %v869, %v865
        %v1033 = vpack.c.bf16 %v871, %v867
        %v1034 = vpack.c.bf16 %v877, %v873
        %v1035 = vpack.c.bf16 %v879, %v875
        %v1036 = vpack.c.bf16 %v885, %v881
        %v1037 = vpack.c.bf16 %v887, %v883
        %v1038 = vpack.c.bf16 %v893, %v889
        %v1039 = vpack.c.bf16 %v895, %v891
        %v1040 = vpack.c.bf16 %v901, %v897
        %v1041 = vpack.c.bf16 %v903, %v899
        %v1042 = vpack.c.bf16 %v909, %v905
        %v1043 = vpack.c.bf16 %v911, %v907
        %v1044 = vpack.c.bf16 %v917, %v913
        %v1045 = vpack.c.bf16 %v919, %v915
        %v1046 = vpack.c.bf16 %v925, %v921
        %v1047 = vpack.c.bf16 %v927, %v923
        %v1048 = vpack.c.bf16 %v933, %v929
        %v1049 = vpack.c.bf16 %v935, %v931
        %v1050 = vpack.c.bf16 %v941, %v937
        %v1051 = vpack.c.bf16 %v943, %v939
        %1052 = vmatprep.subr.bf16.mxu0 %v1035
        %1053 = vmatpush1.bf16.msra.mxu0 %v1034
        %1054 = vmatprep.subr.bf16.mxu0 %v1033
        %1055 = vmatpush1.bf16.msra.mxu0 %v1032
        %1056 = vmatprep.subr.bf16.mxu0 %v1031
        %1057 = vmatpush1.bf16.msra.mxu0 %v1030
        %1058 = vmatprep.subr.bf16.mxu0 %v1029
        %1059 = vmatpush1.bf16.msra.mxu0 %v1028
        %1060 = vmatprep.subr.bf16.mxu0 %v1027
        %1061 = vmatpush1.bf16.msra.mxu0 %v1026
        %1062 = vmatprep.subr.bf16.mxu0 %v1025
        %1063 = vmatpush1.bf16.msra.mxu0 %v1024
        %1064 = vmatprep.subr.bf16.mxu0 %v1023
        %1065 = vmatpush1.bf16.msra.mxu0 %v1022
        %1066 = vmatprep.subr.bf16.mxu0 %v1021
        %1067 = vmatpush1.bf16.msra.mxu0 %v1020
        %1068 = vmatprep.subr.bf16.mxu0 %v1051
        %1069 = vmatpush2.bf16.msra.mxu0 %v1050
        %1070 = vmatprep.subr.bf16.mxu0 %v1049
        %1071 = vmatpush2.bf16.msra.mxu0 %v1048
        %1072 = vmatprep.subr.bf16.mxu0 %v1047
        %1073 = vmatpush2.bf16.msra.mxu0 %v1046
        %1074 = vmatprep.subr.bf16.mxu0 %v1045
        %1075 = vmatpush2.bf16.msra.mxu0 %v1044
        %1076 = vmatprep.subr.bf16.mxu0 %v1043
        %1077 = vmatpush2.bf16.msra.mxu0 %v1042
        %1078 = vmatprep.subr.bf16.mxu0 %v1041
        %1079 = vmatpush2.bf16.msra.mxu0 %v1040
        %1080 = vmatprep.subr.bf16.mxu0 %v1039
        %1081 = vmatpush2.bf16.msra.mxu0 %v1038
        %1082 = vmatprep.subr.bf16.mxu0 %v1037
        %1083 = vmatpush2.bf16.msra.mxu0 %v1036
        %1084 = vmatprep.mubr.bf16.mxu0 %v1019
        %1085 = vmatmul.mubr.bf16.gmra.mxu0 %v1018
        %v1086 = vpop.f32.mrf.mxu0
        %v1087 = vadd.f32 0.0, %v1086
        %v1088 = vpop.f32.mrf.mxu0
        %v1089 = vadd.f32 0.0, %v1088
        %v1090 = vpop.f32.mrf.mxu0
        %v1091 = vpop.f32.mrf.mxu0
        %1092 = vdwg.mxu0
        %v1093 = vrcp.pop %v980
        %v1094 = vrcp.pop %v1017
        %v1095 = vmul.f32 %v1087, %v1093
        %v1096 = vmul.f32 %v1089, %v1094
        %v1097 = vpack.c.bf16 %v384, %v384
        %v1098 = vpack.c.bf16 %v386, %v386
        %v1099 = vpack.c.bf16 %v366, %v366
        %v1100 = vpack.c.bf16 %v368, %v368
        %1101 = vxpose.xlu0.c.b16.start [1/8] %v1097, 128
        %1102 = vxpose.xlu0.c.b16.cont [2/8] 0, 128
        %1103 = vxpose.xlu0.c.b16.cont [3/8] 0, 128
        %1104 = vxpose.xlu0.c.b16.cont [4/8] 0, 128
        %1105 = vxpose.xlu0.c.b16.cont [5/8] 0, 128
        %1106 = vxpose.xlu0.c.b16.cont [6/8] 0, 128
        %1107 = vxpose.xlu0.c.b16.cont [7/8] 0, 128
        %1108 = vxpose.xlu0.c.b16.end [8/8] 0, 128
        %v1109 = vpop.trf.xlu0
        %v1110 = vpop.trf.xlu0
        %v1111 = vpop.trf.xlu0
        %v1112 = vpop.trf.xlu0
        %v1113 = vpop.trf.xlu0
        %v1114 = vpop.trf.xlu0
        %v1115 = vpop.trf.xlu0
        %v1116 = vpop.trf.xlu0
        %1117 = vxpose.xlu0.c.b16.start [1/8] %v1098, 128
        %1118 = vxpose.xlu0.c.b16.cont [2/8] 0, 128
        %1119 = vxpose.xlu0.c.b16.cont [3/8] 0, 128
        %1120 = vxpose.xlu0.c.b16.cont [4/8] 0, 128
        %1121 = vxpose.xlu0.c.b16.cont [5/8] 0, 128
        %1122 = vxpose.xlu0.c.b16.cont [6/8] 0, 128
        %1123 = vxpose.xlu0.c.b16.cont [7/8] 0, 128
        %1124 = vxpose.xlu0.c.b16.end [8/8] 0, 128
        %v1125 = vpop.trf.xlu0
        %v1126 = vpop.trf.xlu0
        %v1127 = vpop.trf.xlu0
        %v1128 = vpop.trf.xlu0
        %v1129 = vpop.trf.xlu0
        %v1130 = vpop.trf.xlu0
        %v1131 = vpop.trf.xlu0
        %v1132 = vpop.trf.xlu0
        %v1134 = vsel %vm430, %v1109, 0
        %v1137 = vsel %vm430, %v1110, 0
        %v1140 = vsel %vm430, %v1111, 0
        %v1143 = vsel %vm430, %v1112, 0
        %v1146 = vsel %vm430, %v1113, 0
        %v1149 = vsel %vm430, %v1114, 0
        %v1152 = vsel %vm430, %v1115, 0
        %v1155 = vsel %vm430, %v1116, 0
        %v1158 = vsel %vm430, %v1125, 0
        %v1161 = vsel %vm430, %v1126, 0
        %v1164 = vsel %vm430, %v1127, 0
        %v1167 = vsel %vm430, %v1128, 0
        %v1170 = vsel %vm430, %v1129, 0
        %v1173 = vsel %vm430, %v1130, 0
        %v1176 = vsel %vm430, %v1131, 0
        %v1179 = vsel %vm430, %v1132, 0
        %v1182 = vsel %vm288, %v1099, 0
        %v1185 = vsel %vm288, %v1100, 0
        %1187 = vmatprep.subr.bf16.mxu0 0
        %1188 = vmatpush1.bf16.msra.mxu0 0
        %1189 = vmatprep.subr.bf16.mxu0 0
        %1190 = vmatpush1.bf16.msra.mxu0 0
        %1191 = vmatprep.subr.bf16.mxu0 0
        %1192 = vmatpush1.bf16.msra.mxu0 0
        %1193 = vmatprep.subr.bf16.mxu0 0
        %1194 = vmatpush1.bf16.msra.mxu0 0
        %1195 = vmatprep.subr.bf16.mxu0 0
        %1196 = vmatpush1.bf16.msra.mxu0 0
        %1197 = vmatprep.subr.bf16.mxu0 0
        %1198 = vmatpush1.bf16.msra.mxu0 0
        %1199 = vmatprep.subr.bf16.mxu0 0
        %1200 = vmatpush1.bf16.msra.mxu0 0
        %1201 = vmatprep.subr.bf16.mxu0 %v1185
        %1202 = vmatpush1.bf16.msra.mxu0 %v1182
        %1203 = vmatprep.subr.bf16.mxu0 0
        %1204 = vmatpush2.bf16.msra.mxu0 0
        %1205 = vmatprep.subr.bf16.mxu0 0
        %1206 = vmatpush2.bf16.msra.mxu0 0
        %1207 = vmatprep.subr.bf16.mxu0 0
        %1208 = vmatpush2.bf16.msra.mxu0 0
        %1209 = vmatprep.subr.bf16.mxu0 0
        %1210 = vmatpush2.bf16.msra.mxu0 0
        %1211 = vmatprep.subr.bf16.mxu0 0
        %1212 = vmatpush2.bf16.msra.mxu0 0
        %1213 = vmatprep.subr.bf16.mxu0 0
        %1214 = vmatpush2.bf16.msra.mxu0 0
        %1215 = vmatprep.subr.bf16.mxu0 0
        %1216 = vmatpush2.bf16.msra.mxu0 0
        %1217 = vmatprep.subr.bf16.mxu0 0
        %1218 = vmatpush2.bf16.msra.mxu0 0
        %1219 = vmatprep.mubr.bf16.mxu0 0
        %1220 = vmatmul.mubr.bf16.gmra.mxu0 %v1134
        %v1221 = vpop.f32.mrf.mxu0
        %v1222 = vadd.f32 0.0, %v1221
        %v1223 = vpop.f32.mrf.mxu0
        %v1224 = vadd.f32 0.0, %v1223
        %v1225 = vpop.f32.mrf.mxu0
        %v1226 = vadd.f32 0.0, %v1225
        %v1227 = vpop.f32.mrf.mxu0
        %v1228 = vadd.f32 0.0, %v1227
        %1229 = vmatprep.mubr.bf16.mxu0 0
        %1230 = vmatmul.mubr.bf16.gmra.mxu0 %v1137
        %v1231 = vpop.f32.mrf.mxu0
        %v1232 = vadd.f32 0.0, %v1231
        %v1233 = vpop.f32.mrf.mxu0
        %v1234 = vadd.f32 0.0, %v1233
        %v1235 = vpop.f32.mrf.mxu0
        %v1236 = vadd.f32 0.0, %v1235
        %v1237 = vpop.f32.mrf.mxu0
        %v1238 = vadd.f32 0.0, %v1237
        %1239 = vmatprep.mubr.bf16.mxu0 0
        %1240 = vmatmul.mubr.bf16.gmra.mxu0 %v1140
        %v1241 = vpop.f32.mrf.mxu0
        %v1242 = vadd.f32 0.0, %v1241
        %v1243 = vpop.f32.mrf.mxu0
        %v1244 = vadd.f32 0.0, %v1243
        %v1245 = vpop.f32.mrf.mxu0
        %v1246 = vadd.f32 0.0, %v1245
        %v1247 = vpop.f32.mrf.mxu0
        %v1248 = vadd.f32 0.0, %v1247
        %1249 = vmatprep.mubr.bf16.mxu0 0
        %1250 = vmatmul.mubr.bf16.gmra.mxu0 %v1143
        %v1251 = vpop.f32.mrf.mxu0
        %v1252 = vadd.f32 0.0, %v1251
        %v1253 = vpop.f32.mrf.mxu0
        %v1254 = vadd.f32 0.0, %v1253
        %v1255 = vpop.f32.mrf.mxu0
        %v1256 = vadd.f32 0.0, %v1255
        %v1257 = vpop.f32.mrf.mxu0
        %v1258 = vadd.f32 0.0, %v1257
        %1259 = vmatprep.mubr.bf16.mxu0 0
        %1260 = vmatmul.mubr.bf16.gmra.mxu0 %v1146
        %v1261 = vpop.f32.mrf.mxu0
        %v1262 = vadd.f32 0.0, %v1261
        %v1263 = vpop.f32.mrf.mxu0
        %v1264 = vadd.f32 0.0, %v1263
        %v1265 = vpop.f32.mrf.mxu0
        %v1266 = vadd.f32 0.0, %v1265
        %v1267 = vpop.f32.mrf.mxu0
        %v1268 = vadd.f32 0.0, %v1267
        %1269 = vmatprep.mubr.bf16.mxu0 0
        %1270 = vmatmul.mubr.bf16.gmra.mxu0 %v1149
        %v1271 = vpop.f32.mrf.mxu0
        %v1272 = vadd.f32 0.0, %v1271
        %v1273 = vpop.f32.mrf.mxu0
        %v1274 = vadd.f32 0.0, %v1273
        %v1275 = vpop.f32.mrf.mxu0
        %v1276 = vadd.f32 0.0, %v1275
        %v1277 = vpop.f32.mrf.mxu0
        %v1278 = vadd.f32 0.0, %v1277
        %1279 = vmatprep.mubr.bf16.mxu0 0
        %1280 = vmatmul.mubr.bf16.gmra.mxu0 %v1152
        %v1281 = vpop.f32.mrf.mxu0
        %v1282 = vadd.f32 0.0, %v1281
        %v1283 = vpop.f32.mrf.mxu0
        %v1284 = vadd.f32 0.0, %v1283
        %v1285 = vpop.f32.mrf.mxu0
        %v1286 = vadd.f32 0.0, %v1285
        %v1287 = vpop.f32.mrf.mxu0
        %v1288 = vadd.f32 0.0, %v1287
        %1289 = vmatprep.mubr.bf16.mxu0 0
        %1290 = vmatmul.mubr.bf16.gmra.mxu0 %v1155
        %v1291 = vpop.f32.mrf.mxu0
        %v1292 = vadd.f32 0.0, %v1291
        %v1293 = vpop.f32.mrf.mxu0
        %v1294 = vadd.f32 0.0, %v1293
        %v1295 = vpop.f32.mrf.mxu0
        %v1296 = vadd.f32 0.0, %v1295
        %v1297 = vpop.f32.mrf.mxu0
        %v1298 = vadd.f32 0.0, %v1297
        %1299 = vmatprep.mubr.bf16.mxu0 0
        %1300 = vmatmul.mubr.bf16.gmra.mxu0 %v1158
        %v1301 = vpop.f32.mrf.mxu0
        %v1302 = vadd.f32 0.0, %v1301
        %v1303 = vpop.f32.mrf.mxu0
        %v1304 = vadd.f32 0.0, %v1303
        %v1305 = vpop.f32.mrf.mxu0
        %v1306 = vadd.f32 0.0, %v1305
        %v1307 = vpop.f32.mrf.mxu0
        %v1308 = vadd.f32 0.0, %v1307
        %1309 = vmatprep.mubr.bf16.mxu0 0
        %1310 = vmatmul.mubr.bf16.gmra.mxu0 %v1161
        %v1311 = vpop.f32.mrf.mxu0
        %v1312 = vadd.f32 0.0, %v1311
        %v1313 = vpop.f32.mrf.mxu0
        %v1314 = vadd.f32 0.0, %v1313
        %v1315 = vpop.f32.mrf.mxu0
        %v1316 = vadd.f32 0.0, %v1315
        %v1317 = vpop.f32.mrf.mxu0
        %v1318 = vadd.f32 0.0, %v1317
        %1319 = vmatprep.mubr.bf16.mxu0 0
        %1320 = vmatmul.mubr.bf16.gmra.mxu0 %v1164
        %v1321 = vpop.f32.mrf.mxu0
        %v1322 = vadd.f32 0.0, %v1321
        %v1323 = vpop.f32.mrf.mxu0
        %v1324 = vadd.f32 0.0, %v1323
        %v1325 = vpop.f32.mrf.mxu0
        %v1326 = vadd.f32 0.0, %v1325
        %v1327 = vpop.f32.mrf.mxu0
        %v1328 = vadd.f32 0.0, %v1327
        %1329 = vmatprep.mubr.bf16.mxu0 0
        %1330 = vmatmul.mubr.bf16.gmra.mxu0 %v1167
        %v1331 = vpop.f32.mrf.mxu0
        %v1332 = vadd.f32 0.0, %v1331
        %v1333 = vpop.f32.mrf.mxu0
        %v1334 = vadd.f32 0.0, %v1333
        %v1335 = vpop.f32.mrf.mxu0
        %v1336 = vadd.f32 0.0, %v1335
        %v1337 = vpop.f32.mrf.mxu0
        %v1338 = vadd.f32 0.0, %v1337
        %1339 = vmatprep.mubr.bf16.mxu0 0
        %1340 = vmatmul.mubr.bf16.gmra.mxu0 %v1170
        %v1341 = vpop.f32.mrf.mxu0
        %v1342 = vadd.f32 0.0, %v1341
        %v1343 = vpop.f32.mrf.mxu0
        %v1344 = vadd.f32 0.0, %v1343
        %v1345 = vpop.f32.mrf.mxu0
        %v1346 = vadd.f32 0.0, %v1345
        %v1347 = vpop.f32.mrf.mxu0
        %v1348 = vadd.f32 0.0, %v1347
        %1349 = vmatprep.mubr.bf16.mxu0 0
        %1350 = vmatmul.mubr.bf16.gmra.mxu0 %v1173
        %v1351 = vpop.f32.mrf.mxu0
        %v1352 = vadd.f32 0.0, %v1351
        %v1353 = vpop.f32.mrf.mxu0
        %v1354 = vadd.f32 0.0, %v1353
        %v1355 = vpop.f32.mrf.mxu0
        %v1356 = vadd.f32 0.0, %v1355
        %v1357 = vpop.f32.mrf.mxu0
        %v1358 = vadd.f32 0.0, %v1357
        %1359 = vmatprep.mubr.bf16.mxu0 0
        %1360 = vmatmul.mubr.bf16.gmra.mxu0 %v1176
        %v1361 = vpop.f32.mrf.mxu0
        %v1362 = vadd.f32 0.0, %v1361
        %v1363 = vpop.f32.mrf.mxu0
        %v1364 = vadd.f32 0.0, %v1363
        %v1365 = vpop.f32.mrf.mxu0
        %v1366 = vadd.f32 0.0, %v1365
        %v1367 = vpop.f32.mrf.mxu0
        %v1368 = vadd.f32 0.0, %v1367
        %1369 = vmatprep.mubr.bf16.mxu0 0
        %1370 = vmatmul.mubr.bf16.gmra.mxu0 %v1179
        %v1371 = vpop.f32.mrf.mxu0
        %v1372 = vadd.f32 0.0, %v1371
        %v1373 = vpop.f32.mrf.mxu0
        %v1374 = vadd.f32 0.0, %v1373
        %v1375 = vpop.f32.mrf.mxu0
        %v1376 = vadd.f32 0.0, %v1375
        %v1377 = vpop.f32.mrf.mxu0
        %v1378 = vadd.f32 0.0, %v1377
        %1379 = vdwg.mxu0
        %v1380 = vmax.f32 %v1222, %v1232
        %v1381 = vmax.f32 %v1226, %v1236
        %v1382 = vmax.f32 %v1380, %v1242
        %v1383 = vmax.f32 %v1381, %v1246
        %v1384 = vmax.f32 %v1382, %v1252
        %v1385 = vmax.f32 %v1383, %v1256
        %v1386 = vmax.f32 %v1384, %v1262
        %v1387 = vmax.f32 %v1385, %v1266
        %v1388 = vmax.f32 %v1386, %v1272
        %v1389 = vmax.f32 %v1387, %v1276
        %v1390 = vmax.f32 %v1388, %v1282
        %v1391 = vmax.f32 %v1389, %v1286
        %v1392 = vmax.f32 %v1390, %v1292
        %v1393 = vmax.f32 %v1391, %v1296
        %v1394 = vmax.f32 %v1392, %v1302
        %v1395 = vmax.f32 %v1393, %v1306
        %v1396 = vmax.f32 %v1394, %v1312
        %v1397 = vmax.f32 %v1395, %v1316
        %v1398 = vmax.f32 %v1396, %v1322
        %v1399 = vmax.f32 %v1397, %v1326
        %v1400 = vmax.f32 %v1398, %v1332
        %v1401 = vmax.f32 %v1399, %v1336
        %v1402 = vmax.f32 %v1400, %v1342
        %v1403 = vmax.f32 %v1401, %v1346
        %v1404 = vmax.f32 %v1402, %v1352
        %v1405 = vmax.f32 %v1403, %v1356
        %v1406 = vmax.f32 %v1404, %v1362
        %v1407 = vmax.f32 %v1405, %v1366
        %v1408 = vmax.f32 %v1406, %v1372
        %v1409 = vmax.f32 %v1407, %v1376
        %v1410 = vmax.f32 %v1408, %v1409
        %v1411 = vrot.slane %v1410, 4
        %v1412 = vmax.f32 %v1410, %v1411
        %v1413 = vrot.slane %v1412, 2
        %v1414 = vmax.f32 %v1412, %v1413
        %v1415 = vrot.slane %v1414, 1
        %v1416 = vmax.f32 %v1414, %v1415
        %v1417 = vmax.f32 %v1224, %v1234
        %v1418 = vmax.f32 %v1228, %v1238
        %v1419 = vmax.f32 %v1417, %v1244
        %v1420 = vmax.f32 %v1418, %v1248
        %v1421 = vmax.f32 %v1419, %v1254
        %v1422 = vmax.f32 %v1420, %v1258
        %v1423 = vmax.f32 %v1421, %v1264
        %v1424 = vmax.f32 %v1422, %v1268
        %v1425 = vmax.f32 %v1423, %v1274
        %v1426 = vmax.f32 %v1424, %v1278
        %v1427 = vmax.f32 %v1425, %v1284
        %v1428 = vmax.f32 %v1426, %v1288
        %v1429 = vmax.f32 %v1427, %v1294
        %v1430 = vmax.f32 %v1428, %v1298
        %v1431 = vmax.f32 %v1429, %v1304
        %v1432 = vmax.f32 %v1430, %v1308
        %v1433 = vmax.f32 %v1431, %v1314
        %v1434 = vmax.f32 %v1432, %v1318
        %v1435 = vmax.f32 %v1433, %v1324
        %v1436 = vmax.f32 %v1434, %v1328
        %v1437 = vmax.f32 %v1435, %v1334
        %v1438 = vmax.f32 %v1436, %v1338
        %v1439 = vmax.f32 %v1437, %v1344
        %v1440 = vmax.f32 %v1438, %v1348
        %v1441 = vmax.f32 %v1439, %v1354
        %v1442 = vmax.f32 %v1440, %v1358
        %v1443 = vmax.f32 %v1441, %v1364
        %v1444 = vmax.f32 %v1442, %v1368
        %v1445 = vmax.f32 %v1443, %v1374
        %v1446 = vmax.f32 %v1444, %v1378
        %v1447 = vmax.f32 %v1445, %v1446
        %v1448 = vrot.slane %v1447, 4
        %v1449 = vmax.f32 %v1447, %v1448
        %v1450 = vrot.slane %v1449, 2
        %v1451 = vmax.f32 %v1449, %v1450
        %v1452 = vrot.slane %v1451, 1
        %v1453 = vmax.f32 %v1451, %v1452
        %v1454 = vsub.f32 %v1222, %v1416
        %v1455 = vsub.f32 %v1224, %v1453
        %v1456 = vsub.f32 %v1226, %v1416
        %v1457 = vsub.f32 %v1228, %v1453
        %v1458 = vsub.f32 %v1232, %v1416
        %v1459 = vsub.f32 %v1234, %v1453
        %v1460 = vsub.f32 %v1236, %v1416
        %v1461 = vsub.f32 %v1238, %v1453
        %v1462 = vsub.f32 %v1242, %v1416
        %v1463 = vsub.f32 %v1244, %v1453
        %v1464 = vsub.f32 %v1246, %v1416
        %v1465 = vsub.f32 %v1248, %v1453
        %v1466 = vsub.f32 %v1252, %v1416
        %v1467 = vsub.f32 %v1254, %v1453
        %v1468 = vsub.f32 %v1256, %v1416
        %v1469 = vsub.f32 %v1258, %v1453
        %v1470 = vsub.f32 %v1262, %v1416
        %v1471 = vsub.f32 %v1264, %v1453
        %v1472 = vsub.f32 %v1266, %v1416
        %v1473 = vsub.f32 %v1268, %v1453
        %v1474 = vsub.f32 %v1272, %v1416
        %v1475 = vsub.f32 %v1274, %v1453
        %v1476 = vsub.f32 %v1276, %v1416
        %v1477 = vsub.f32 %v1278, %v1453
        %v1478 = vsub.f32 %v1282, %v1416
        %v1479 = vsub.f32 %v1284, %v1453
        %v1480 = vsub.f32 %v1286, %v1416
        %v1481 = vsub.f32 %v1288, %v1453
        %v1482 = vsub.f32 %v1292, %v1416
        %v1483 = vsub.f32 %v1294, %v1453
        %v1484 = vsub.f32 %v1296, %v1416
        %v1485 = vsub.f32 %v1298, %v1453
        %v1486 = vsub.f32 %v1302, %v1416
        %v1487 = vsub.f32 %v1304, %v1453
        %v1488 = vsub.f32 %v1306, %v1416
        %v1489 = vsub.f32 %v1308, %v1453
        %v1490 = vsub.f32 %v1312, %v1416
        %v1491 = vsub.f32 %v1314, %v1453
        %v1492 = vsub.f32 %v1316, %v1416
        %v1493 = vsub.f32 %v1318, %v1453
        %v1494 = vsub.f32 %v1322, %v1416
        %v1495 = vsub.f32 %v1324, %v1453
        %v1496 = vsub.f32 %v1326, %v1416
        %v1497 = vsub.f32 %v1328, %v1453
        %v1498 = vsub.f32 %v1332, %v1416
        %v1499 = vsub.f32 %v1334, %v1453
        %v1500 = vsub.f32 %v1336, %v1416
        %v1501 = vsub.f32 %v1338, %v1453
        %v1502 = vsub.f32 %v1342, %v1416
        %v1503 = vsub.f32 %v1344, %v1453
        %v1504 = vsub.f32 %v1346, %v1416
        %v1505 = vsub.f32 %v1348, %v1453
        %v1506 = vsub.f32 %v1352, %v1416
        %v1507 = vsub.f32 %v1354, %v1453
        %v1508 = vsub.f32 %v1356, %v1416
        %v1509 = vsub.f32 %v1358, %v1453
        %v1510 = vsub.f32 %v1362, %v1416
        %v1511 = vsub.f32 %v1364, %v1453
        %v1512 = vsub.f32 %v1366, %v1416
        %v1513 = vsub.f32 %v1368, %v1453
        %v1514 = vsub.f32 %v1372, %v1416
        %v1515 = vsub.f32 %v1374, %v1453
        %v1516 = vsub.f32 %v1376, %v1416
        %v1517 = vsub.f32 %v1378, %v1453
        %v1518 = vmul.f32 %v1454, 1.442695
        %v1519 = vpow.pop %v1518
        %v1520 = vmul.f32 %v1455, 1.442695
        %v1521 = vpow.pop %v1520
        %v1522 = vmul.f32 %v1456, 1.442695
        %v1523 = vpow.pop %v1522
        %v1524 = vmul.f32 %v1457, 1.442695
        %v1525 = vpow.pop %v1524
        %v1526 = vmul.f32 %v1458, 1.442695
        %v1527 = vpow.pop %v1526
        %v1528 = vmul.f32 %v1459, 1.442695
        %v1529 = vpow.pop %v1528
        %v1530 = vmul.f32 %v1460, 1.442695
        %v1531 = vpow.pop %v1530
        %v1532 = vmul.f32 %v1461, 1.442695
        %v1533 = vpow.pop %v1532
        %v1534 = vmul.f32 %v1462, 1.442695
        %v1535 = vpow.pop %v1534
        %v1536 = vmul.f32 %v1463, 1.442695
        %v1537 = vpow.pop %v1536
        %v1538 = vmul.f32 %v1464, 1.442695
        %v1539 = vpow.pop %v1538
        %v1540 = vmul.f32 %v1465, 1.442695
        %v1541 = vpow.pop %v1540
        %v1542 = vmul.f32 %v1466, 1.442695
        %v1543 = vpow.pop %v1542
        %v1544 = vmul.f32 %v1467, 1.442695
        %v1545 = vpow.pop %v1544
        %v1546 = vmul.f32 %v1468, 1.442695
        %v1547 = vpow.pop %v1546
        %v1548 = vmul.f32 %v1469, 1.442695
        %v1549 = vpow.pop %v1548
        %v1550 = vmul.f32 %v1470, 1.442695
        %v1551 = vpow.pop %v1550
        %v1552 = vmul.f32 %v1471, 1.442695
        %v1553 = vpow.pop %v1552
        %v1554 = vmul.f32 %v1472, 1.442695
        %v1555 = vpow.pop %v1554
        %v1556 = vmul.f32 %v1473, 1.442695
        %v1557 = vpow.pop %v1556
        %v1558 = vmul.f32 %v1474, 1.442695
        %v1559 = vpow.pop %v1558
        %v1560 = vmul.f32 %v1475, 1.442695
        %v1561 = vpow.pop %v1560
        %v1562 = vmul.f32 %v1476, 1.442695
        %v1563 = vpow.pop %v1562
        %v1564 = vmul.f32 %v1477, 1.442695
        %v1565 = vpow.pop %v1564
        %v1566 = vmul.f32 %v1478, 1.442695
        %v1567 = vpow.pop %v1566
        %v1568 = vmul.f32 %v1479, 1.442695
        %v1569 = vpow.pop %v1568
        %v1570 = vmul.f32 %v1480, 1.442695
        %v1571 = vpow.pop %v1570
        %v1572 = vmul.f32 %v1481, 1.442695
        %v1573 = vpow.pop %v1572
        %v1574 = vmul.f32 %v1482, 1.442695
        %v1575 = vpow.pop %v1574
        %v1576 = vmul.f32 %v1483, 1.442695
        %v1577 = vpow.pop %v1576
        %v1578 = vmul.f32 %v1484, 1.442695
        %v1579 = vpow.pop %v1578
        %v1580 = vmul.f32 %v1485, 1.442695
        %v1581 = vpow.pop %v1580
        %v1582 = vmul.f32 %v1486, 1.442695
        %v1583 = vpow.pop %v1582
        %v1584 = vmul.f32 %v1487, 1.442695
        %v1585 = vpow.pop %v1584
        %v1586 = vmul.f32 %v1488, 1.442695
        %v1587 = vpow.pop %v1586
        %v1588 = vmul.f32 %v1489, 1.442695
        %v1589 = vpow.pop %v1588
        %v1590 = vmul.f32 %v1490, 1.442695
        %v1591 = vpow.pop %v1590
        %v1592 = vmul.f32 %v1491, 1.442695
        %v1593 = vpow.pop %v1592
        %v1594 = vmul.f32 %v1492, 1.442695
        %v1595 = vpow.pop %v1594
        %v1596 = vmul.f32 %v1493, 1.442695
        %v1597 = vpow.pop %v1596
        %v1598 = vmul.f32 %v1494, 1.442695
        %v1599 = vpow.pop %v1598
        %v1600 = vmul.f32 %v1495, 1.442695
        %v1601 = vpow.pop %v1600
        %v1602 = vmul.f32 %v1496, 1.442695
        %v1603 = vpow.pop %v1602
        %v1604 = vmul.f32 %v1497, 1.442695
        %v1605 = vpow.pop %v1604
        %v1606 = vmul.f32 %v1498, 1.442695
        %v1607 = vpow.pop %v1606
        %v1608 = vmul.f32 %v1499, 1.442695
        %v1609 = vpow.pop %v1608
        %v1610 = vmul.f32 %v1500, 1.442695
        %v1611 = vpow.pop %v1610
        %v1612 = vmul.f32 %v1501, 1.442695
        %v1613 = vpow.pop %v1612
        %v1614 = vmul.f32 %v1502, 1.442695
        %v1615 = vpow.pop %v1614
        %v1616 = vmul.f32 %v1503, 1.442695
        %v1617 = vpow.pop %v1616
        %v1618 = vmul.f32 %v1504, 1.442695
        %v1619 = vpow.pop %v1618
        %v1620 = vmul.f32 %v1505, 1.442695
        %v1621 = vpow.pop %v1620
        %v1622 = vmul.f32 %v1506, 1.442695
        %v1623 = vpow.pop %v1622
        %v1624 = vmul.f32 %v1507, 1.442695
        %v1625 = vpow.pop %v1624
        %v1626 = vmul.f32 %v1508, 1.442695
        %v1627 = vpow.pop %v1626
        %v1628 = vmul.f32 %v1509, 1.442695
        %v1629 = vpow.pop %v1628
        %v1630 = vmul.f32 %v1510, 1.442695
        %v1631 = vpow.pop %v1630
        %v1632 = vmul.f32 %v1511, 1.442695
        %v1633 = vpow.pop %v1632
        %v1634 = vmul.f32 %v1512, 1.442695
        %v1635 = vpow.pop %v1634
        %v1636 = vmul.f32 %v1513, 1.442695
        %v1637 = vpow.pop %v1636
        %v1638 = vmul.f32 %v1514, 1.442695
        %v1639 = vpow.pop %v1638
        %v1640 = vmul.f32 %v1515, 1.442695
        %v1641 = vpow.pop %v1640
        %v1642 = vmul.f32 %v1516, 1.442695
        %v1643 = vpow.pop %v1642
        %v1644 = vmul.f32 %v1517, 1.442695
        %v1645 = vpow.pop %v1644
        %v1646 = vadd.f32 %v1519, %v1523
        %v1647 = vadd.f32 %v1646, %v1527
        %v1648 = vadd.f32 %v1647, %v1531
        %v1649 = vadd.f32 %v1648, %v1535
        %v1650 = vadd.f32 %v1649, %v1539
        %v1651 = vadd.f32 %v1650, %v1543
        %v1652 = vadd.f32 %v1651, %v1547
        %v1653 = vadd.f32 %v1652, %v1551
        %v1654 = vadd.f32 %v1653, %v1555
        %v1655 = vadd.f32 %v1654, %v1559
        %v1656 = vadd.f32 %v1655, %v1563
        %v1657 = vadd.f32 %v1656, %v1567
        %v1658 = vadd.f32 %v1657, %v1571
        %v1659 = vadd.f32 %v1658, %v1575
        %v1660 = vadd.f32 %v1659, %v1579
        %v1661 = vadd.f32 %v1660, %v1583
        %v1662 = vadd.f32 %v1661, %v1587
        %v1663 = vadd.f32 %v1662, %v1591
        %v1664 = vadd.f32 %v1663, %v1595
        %v1665 = vadd.f32 %v1664, %v1599
        %v1666 = vadd.f32 %v1665, %v1603
        %v1667 = vadd.f32 %v1666, %v1607
        %v1668 = vadd.f32 %v1667, %v1611
        %v1669 = vadd.f32 %v1668, %v1615
        %v1670 = vadd.f32 %v1669, %v1619
        %v1671 = vadd.f32 %v1670, %v1623
        %v1672 = vadd.f32 %v1671, %v1627
        %v1673 = vadd.f32 %v1672, %v1631
        %v1674 = vadd.f32 %v1673, %v1635
        %v1675 = vadd.f32 %v1674, %v1639
        %v1676 = vadd.f32 %v1675, %v1643
        %v1677 = vrot.slane %v1676, 4
        %v1678 = vadd.f32 %v1676, %v1677
        %v1679 = vrot.slane %v1678, 2
        %v1680 = vadd.f32 %v1678, %v1679
        %v1681 = vrot.slane %v1680, 1
        %v1682 = vadd.f32 %v1680, %v1681
        %v1683 = vadd.f32 %v1521, %v1525
        %v1684 = vadd.f32 %v1683, %v1529
        %v1685 = vadd.f32 %v1684, %v1533
        %v1686 = vadd.f32 %v1685, %v1537
        %v1687 = vadd.f32 %v1686, %v1541
        %v1688 = vadd.f32 %v1687, %v1545
        %v1689 = vadd.f32 %v1688, %v1549
        %v1690 = vadd.f32 %v1689, %v1553
        %v1691 = vadd.f32 %v1690, %v1557
        %v1692 = vadd.f32 %v1691, %v1561
        %v1693 = vadd.f32 %v1692, %v1565
        %v1694 = vadd.f32 %v1693, %v1569
        %v1695 = vadd.f32 %v1694, %v1573
        %v1696 = vadd.f32 %v1695, %v1577
        %v1697 = vadd.f32 %v1696, %v1581
        %v1698 = vadd.f32 %v1697, %v1585
        %v1699 = vadd.f32 %v1698, %v1589
        %v1700 = vadd.f32 %v1699, %v1593
        %v1701 = vadd.f32 %v1700, %v1597
        %v1702 = vadd.f32 %v1701, %v1601
        %v1703 = vadd.f32 %v1702, %v1605
        %v1704 = vadd.f32 %v1703, %v1609
        %v1705 = vadd.f32 %v1704, %v1613
        %v1706 = vadd.f32 %v1705, %v1617
        %v1707 = vadd.f32 %v1706, %v1621
        %v1708 = vadd.f32 %v1707, %v1625
        %v1709 = vadd.f32 %v1708, %v1629
        %v1710 = vadd.f32 %v1709, %v1633
        %v1711 = vadd.f32 %v1710, %v1637
        %v1712 = vadd.f32 %v1711, %v1641
        %v1713 = vadd.f32 %v1712, %v1645
        %v1714 = vrot.slane %v1713, 4
        %v1715 = vadd.f32 %v1713, %v1714
        %v1716 = vrot.slane %v1715, 2
        %v1717 = vadd.f32 %v1715, %v1716
        %v1718 = vrot.slane %v1717, 1
        %v1719 = vadd.f32 %v1717, %v1718
        %v1720 = vpack.c.bf16 %v390, %v390
        %v1721 = vpack.c.bf16 %v392, %v392
        %v1722 = vpack.c.bf16 %v1523, %v1519
        %v1723 = vpack.c.bf16 %v1525, %v1521
        %v1724 = vpack.c.bf16 %v1531, %v1527
        %v1725 = vpack.c.bf16 %v1533, %v1529
        %v1726 = vpack.c.bf16 %v1539, %v1535
        %v1727 = vpack.c.bf16 %v1541, %v1537
        %v1728 = vpack.c.bf16 %v1547, %v1543
        %v1729 = vpack.c.bf16 %v1549, %v1545
        %v1730 = vpack.c.bf16 %v1555, %v1551
        %v1731 = vpack.c.bf16 %v1557, %v1553
        %v1732 = vpack.c.bf16 %v1563, %v1559
        %v1733 = vpack.c.bf16 %v1565, %v1561
        %v1734 = vpack.c.bf16 %v1571, %v1567
        %v1735 = vpack.c.bf16 %v1573, %v1569
        %v1736 = vpack.c.bf16 %v1579, %v1575
        %v1737 = vpack.c.bf16 %v1581, %v1577
        %v1738 = vpack.c.bf16 %v1587, %v1583
        %v1739 = vpack.c.bf16 %v1589, %v1585
        %v1740 = vpack.c.bf16 %v1595, %v1591
        %v1741 = vpack.c.bf16 %v1597, %v1593
        %v1742 = vpack.c.bf16 %v1603, %v1599
        %v1743 = vpack.c.bf16 %v1605, %v1601
        %v1744 = vpack.c.bf16 %v1611, %v1607
        %v1745 = vpack.c.bf16 %v1613, %v1609
        %v1746 = vpack.c.bf16 %v1619, %v1615
        %v1747 = vpack.c.bf16 %v1621, %v1617
        %v1748 = vpack.c.bf16 %v1627, %v1623
        %v1749 = vpack.c.bf16 %v1629, %v1625
        %v1750 = vpack.c.bf16 %v1635, %v1631
        %v1751 = vpack.c.bf16 %v1637, %v1633
        %v1752 = vpack.c.bf16 %v1643, %v1639
        %v1753 = vpack.c.bf16 %v1645, %v1641
        %1754 = vmatprep.subr.bf16.mxu0 %v1737
        %1755 = vmatpush1.bf16.msra.mxu0 %v1736
        %1756 = vmatprep.subr.bf16.mxu0 %v1735
        %1757 = vmatpush1.bf16.msra.mxu0 %v1734
        %1758 = vmatprep.subr.bf16.mxu0 %v1733
        %1759 = vmatpush1.bf16.msra.mxu0 %v1732
        %1760 = vmatprep.subr.bf16.mxu0 %v1731
        %1761 = vmatpush1.bf16.msra.mxu0 %v1730
        %1762 = vmatprep.subr.bf16.mxu0 %v1729
        %1763 = vmatpush1.bf16.msra.mxu0 %v1728
        %1764 = vmatprep.subr.bf16.mxu0 %v1727
        %1765 = vmatpush1.bf16.msra.mxu0 %v1726
        %1766 = vmatprep.subr.bf16.mxu0 %v1725
        %1767 = vmatpush1.bf16.msra.mxu0 %v1724
        %1768 = vmatprep.subr.bf16.mxu0 %v1723
        %1769 = vmatpush1.bf16.msra.mxu0 %v1722
        %1770 = vmatprep.subr.bf16.mxu0 %v1753
        %1771 = vmatpush2.bf16.msra.mxu0 %v1752
        %1772 = vmatprep.subr.bf16.mxu0 %v1751
        %1773 = vmatpush2.bf16.msra.mxu0 %v1750
        %1774 = vmatprep.subr.bf16.mxu0 %v1749
        %1775 = vmatpush2.bf16.msra.mxu0 %v1748
        %1776 = vmatprep.subr.bf16.mxu0 %v1747
        %1777 = vmatpush2.bf16.msra.mxu0 %v1746
        %1778 = vmatprep.subr.bf16.mxu0 %v1745
        %1779 = vmatpush2.bf16.msra.mxu0 %v1744
        %1780 = vmatprep.subr.bf16.mxu0 %v1743
        %1781 = vmatpush2.bf16.msra.mxu0 %v1742
        %1782 = vmatprep.subr.bf16.mxu0 %v1741
        %1783 = vmatpush2.bf16.msra.mxu0 %v1740
        %1784 = vmatprep.subr.bf16.mxu0 %v1739
        %1785 = vmatpush2.bf16.msra.mxu0 %v1738
        %1786 = vmatprep.mubr.bf16.mxu0 %v1721
        %1787 = vmatmul.mubr.bf16.gmra.mxu0 %v1720
        %v1788 = vpop.f32.mrf.mxu0
        %v1789 = vadd.f32 0.0, %v1788
        %v1790 = vpop.f32.mrf.mxu0
        %v1791 = vadd.f32 0.0, %v1790
        %v1792 = vpop.f32.mrf.mxu0
        %v1793 = vpop.f32.mrf.mxu0
        %1794 = vdwg.mxu0
        %v1795 = vrcp.pop %v1682
        %v1796 = vrcp.pop %v1719
        %v1797 = vmul.f32 %v1789, %v1795
        %v1798 = vmul.f32 %v1791, %v1796
        %v1799 = vld [vmem:[%s3] sm:$0xf]
        %v1800 = vld [vmem:[%s4] sm:$0xf]
        %1802 = vset.pattern.permute.xlu0 0
        %1803 = vperm.xlu0 %1802, %v1800
        %v1804 = vpop.permute.xlu0 %1803
        %vm1806 = vcmask 130048
        %v1808 = vsel %vm1806, %v1799, 0
        %1810 = vmatprep.subr.mxu0 0.0
        %1811 = vmatpush1.msra.mxu0 0.0
        %1812 = vmatprep.subr.mxu0 0.0
        %1813 = vmatpush1.msra.mxu0 0.0
        %1814 = vmatprep.subr.mxu0 0.0
        %1815 = vmatpush1.msra.mxu0 0.0
        %1816 = vmatprep.subr.mxu0 0.0
        %1817 = vmatpush1.msra.mxu0 0.0
        %1818 = vmatprep.subr.mxu0 0.0
        %1819 = vmatpush1.msra.mxu0 0.0
        %1820 = vmatprep.subr.mxu0 0.0
        %1821 = vmatpush1.msra.mxu0 0.0
        %1822 = vmatprep.subr.mxu0 0.0
        %1823 = vmatpush1.msra.mxu0 0.0
        %1824 = vmatprep.subr.mxu0 0.0
        %1825 = vmatpush1.msra.mxu0 0.0
        %1826 = vmatprep.subr.mxu0 0.0
        %1827 = vmatpush1.msra.mxu0 0.0
        %1828 = vmatprep.subr.mxu0 0.0
        %1829 = vmatpush1.msra.mxu0 0.0
        %1830 = vmatprep.subr.mxu0 0.0
        %1831 = vmatpush1.msra.mxu0 0.0
        %1832 = vmatprep.subr.mxu0 0.0
        %1833 = vmatpush1.msra.mxu0 0.0
        %1834 = vmatprep.subr.mxu0 0.0
        %1835 = vmatpush1.msra.mxu0 0.0
        %1836 = vmatprep.subr.mxu0 0.0
        %1837 = vmatpush1.msra.mxu0 0.0
        %1838 = vmatprep.subr.mxu0 %v1798
        %1839 = vmatpush1.msra.mxu0 %v1797
        %1840 = vmatprep.subr.mxu0 %v1096
        %1841 = vmatpush1.msra.mxu0 %v1095
        %1842 = vmatprep.subr.mxu0 0.0
        %1843 = vmatpush2.msra.mxu0 0.0
        %1844 = vmatprep.subr.mxu0 0.0
        %1845 = vmatpush2.msra.mxu0 0.0
        %1846 = vmatprep.subr.mxu0 0.0
        %1847 = vmatpush2.msra.mxu0 0.0
        %1848 = vmatprep.subr.mxu0 0.0
        %1849 = vmatpush2.msra.mxu0 0.0
        %1850 = vmatprep.subr.mxu0 0.0
        %1851 = vmatpush2.msra.mxu0 0.0
        %1852 = vmatprep.subr.mxu0 0.0
        %1853 = vmatpush2.msra.mxu0 0.0
        %1854 = vmatprep.subr.mxu0 0.0
        %1855 = vmatpush2.msra.mxu0 0.0
        %1856 = vmatprep.subr.mxu0 0.0
        %1857 = vmatpush2.msra.mxu0 0.0
        %1858 = vmatprep.subr.mxu0 0.0
        %1859 = vmatpush2.msra.mxu0 0.0
        %1860 = vmatprep.subr.mxu0 0.0
        %1861 = vmatpush2.msra.mxu0 0.0
        %1862 = vmatprep.subr.mxu0 0.0
        %1863 = vmatpush2.msra.mxu0 0.0
        %1864 = vmatprep.subr.mxu0 0.0
        %1865 = vmatpush2.msra.mxu0 0.0
        %1866 = vmatprep.subr.mxu0 0.0
        %1867 = vmatpush2.msra.mxu0 0.0
        %1868 = vmatprep.subr.mxu0 0.0
        %1869 = vmatpush2.msra.mxu0 0.0
        %1870 = vmatprep.subr.mxu0 0.0
        %1871 = vmatpush2.msra.mxu0 0.0
        %1872 = vmatprep.subr.mxu0 0.0
        %1873 = vmatpush2.msra.mxu0 0.0
        %1874 = vmatprep.mubr.f32.mxu0 0.0
        %1875 = vmatmul.mubr.f32.gmra.mxu0 %v1808
        %v1876 = vpop.f32.mrf.mxu0
        %v1877 = vadd.f32 %v1804, %v1876
        %v1878 = vpop.f32.mrf.mxu0
        %v1879 = vadd.f32 %v1804, %v1878
        %1880 = vdwg.mxu0
        %v1883 = vcombine.low %v1877, %v1879
        %1885 = vst [vmem:[%s217] sm:$0xff] %v1883
        %s1886 = sand.u32 %s137, 1
        %s1887 = scalar_lea.sflag [#allocation3], %s1886
        %s1888 = sand.u32 %s137, 1
        %s1889 = smul.addr %s1888, 8
        %s1890 = scalar_lea.vmem [#allocation2], %s1889
        // Predicated region
        $region41: #{tpu_custom_call.1} parent=39 // pred_check
          %p1891 = pneg %p147
        $region42: #{tpu_custom_call.1} parent=39 // pred_check_branch
          %1893 = sbr.rel (%p1891) target = $region44
        $region43: #{tpu_custom_call.1} parent=39 // pred_region
          %s1895 = ssub.s32 128, 128
          %1896 = vsyncadd %s1887, %s1895
          %s1897 = smul.addr %s19, 2
          %s1898 = smul.addr %s1897, 64
          %s1899 = scalar_lea.hbm %s5, %s1898
          %s1901 = sshll.u32 %s1890, 4
          %s1902 = int_to_ptr.vmem [resolvable:$true] %s1901
          %1904 = dma.vmem_to_hbm [thread:$0]  %s1902, 128, %s1899, %s1887
        $region44: #{tpu_custom_call.1} parent=39 // pred_fallthru
          _
      $region40: #{tpu_custom_call.1} parent=5 // pred_fallthru
        _
      %p1905 = scmp.le.s32.totalorder 2, %s14
      // Predicated region
      $region45: #{tpu_custom_call.1} parent=5 // pred_check
        %p1906 = pneg %p1905
      $region46: #{tpu_custom_call.1} parent=5 // pred_check_branch
        %1908 = sbr.rel (%p1906) target = $region48
      $region47: #{tpu_custom_call.1} parent=5 // pred_region
        %s1909 = ssub.s32 %s14, 2
        // Predicated region
        $region49: #{tpu_custom_call.1} parent=47 // pred_check
          %p1910 = pneg %p153
        $region50: #{tpu_custom_call.1} parent=47 // pred_check_branch
          %1912 = sbr.rel (%p1910) target = $region52
        $region51: #{tpu_custom_call.1} parent=47 // pred_region
          %s1913 = sand.u32 %s138, 1
          %s1914 = scalar_lea.sflag [#allocation3], %s1913
          %s1915 = sand.u32 %s138, 1
          %s1916 = smul.addr %s1915, 8
          %s1917 = scalar_lea.vmem [#allocation2], %s1916
          %1918 = dma.done %s1914, 128
        $region52: #{tpu_custom_call.1} parent=47 // pred_fallthru
          _
      $region48: #{tpu_custom_call.1} parent=5 // pred_fallthru
        _
    $region6: #{tpu_custom_call.1} parent=1 // loop_footer
      %s18 = sadd.s32 1, %s14
    $region7: #{tpu_custom_call.1} parent=1 // loop_footer_branch
      %13 = sbr.rel target = $region3
    $region8: #{tpu_custom_call.1} parent=1 // loop_exit
      _
    %1919 = vsyncpa [#allocation3], 1
    %s1920 = scalar_lea.sflag [#allocation3], 1
    %1921 = vsyncpa %s1920, 1

</llo_original>
